<compile_context>
chip_gen: v5e
topology: v5e:2x2
jax: 0.10.0
libtpu: 0.0.40
codegen_flags: <defaults>
</compile_context>

<pallas_src>
import numpy as np
import jax
import jax.numpy as jnp
from jax import lax
from jax.experimental import pallas as pl
from jax.experimental.pallas import tpu as pltpu

LOG_2PI = float(np.log(2.0 * np.pi))


def _iota2(D):
    rowi = lax.broadcasted_iota(jnp.int32, (D, D), 0)
    coli = lax.broadcasted_iota(jnp.int32, (D, D), 1)
    return rowi, coli


def _gauss_jordan_inverse(A, D):
    """Vectorized Gauss-Jordan inverse (no pivoting) of a D x D matrix.

    Returns (A_inv, sum_k log(pivot_k), sum_k pivot_k).  For an SPD input the
    elimination pivots equal diag(cholesky_upper)^2, so the scalar outputs give
    log-det(A) and sum(diag(chol)^2) with no extra factorization.  Valid for the
    matrices this module produces (upper triangular with positive diagonal / SPD).
    """
    rowi, coli = _iota2(D)
    coli_r = lax.broadcasted_iota(jnp.int32, (1, D), 1)
    B0 = jnp.where(rowi == coli, 1.0, 0.0).astype(jnp.float32)
    z11 = jnp.zeros((1, 1), jnp.float32)

    def body(k, carry):
        a, b, slogp, spiv = carry
        krow = rowi == k
        kcol = coli == k
        arow = jnp.sum(jnp.where(krow, a, 0.0), axis=0, keepdims=True)            # (1,D) = A[k,:]
        brow = jnp.sum(jnp.where(krow, b, 0.0), axis=0, keepdims=True)            # (1,D) = B[k,:]
        pivot = jnp.sum(jnp.where(coli_r == k, arow, 0.0), axis=1, keepdims=True)  # (1,1) = A[k,k]
        inv_p = 1.0 / pivot
        arow_n = arow * inv_p
        brow_n = brow * inv_p
        acol = jnp.sum(jnp.where(kcol, a, 0.0), axis=1, keepdims=True)            # (D,1) = A[:,k]
        a = jnp.where(krow, arow_n, a - acol * arow_n)
        b = jnp.where(krow, brow_n, b - acol * brow_n)
        return a, b, slogp + jnp.log(pivot), spiv + pivot

    _, inv, slogp, spiv = lax.fori_loop(0, D, body, (A, B0, z11, z11), unroll=True)
    return inv, slogp, spiv


def _transpose_small(A, D):
    """A^T built row-by-row with iota masks + reductions (avoids a tpu transpose op)."""
    rowi, coli = _iota2(D)
    eye = rowi == coli

    def body(k, at):
        colk = jnp.sum(jnp.where(coli == k, A, 0.0), axis=1, keepdims=True)   # (D,1) = A[:,k]
        rowk = jnp.sum(jnp.where(eye, colk, 0.0), axis=0, keepdims=True)      # (1,D) = A[:,k]^T
        return jnp.where(rowi == k, rowk, at)

    return lax.fori_loop(0, D, body, jnp.zeros_like(A), unroll=True)


def _fused_kernel(mu0_ref, mu1_ref, sample_ref, cho0_ref, cho1_ref, out_ref):
    D = cho0_ref.shape[0]
    rowi, coli = _iota2(D)
    eye = rowi == coli

    mu0_r = mu0_ref[...]          # (1,D)
    mu1_r = mu1_ref[...]          # (1,D)
    x_r = sample_ref[...]         # (1,D)
    cho0 = cho0_ref[...]          # (D,D)
    cho1 = cho1_ref[...]          # (D,D)

    def row_to_col(r):            # (1,D) -> (D,1) via diagonal masking (no transpose)
        return jnp.sum(jnp.where(eye, r, 0.0), axis=1, keepdims=True)

    def col_to_row(c):            # (D,1) -> (1,D)
        return jnp.sum(jnp.where(eye, c, 0.0), axis=0, keepdims=True)

    def sum_all(m):               # (D,D) -> (1,1)
        return jnp.sum(jnp.sum(m, axis=1, keepdims=True), axis=0, keepdims=True)

    mu0_c = row_to_col(mu0_r)
    mu1_c = row_to_col(mu1_r)

    # Reference quirk: lambda_i == cho_i.  eta_i = lambda_i @ mu_i as a VPU+XLU mat-vec.
    eta0_c = jnp.sum(cho0 * mu0_r, axis=1, keepdims=True)                          # (D,1)
    eta1_c = jnp.sum(cho1 * mu1_r, axis=1, keepdims=True)                          # (D,1)

    # Diagonals extracted as lane rows before the log (D EUP logs, not D^2).
    diag0_r = jnp.sum(jnp.where(eye, cho0, 0.0), axis=0, keepdims=True)            # (1,D)
    diag1_r = jnp.sum(jnp.where(eye, cho1, 0.0), axis=0, keepdims=True)
    logdiag0 = jnp.sum(jnp.log(diag0_r * diag0_r), axis=1, keepdims=True)          # (1,1)
    logdiag1 = jnp.sum(jnp.log(diag1_r * diag1_r), axis=1, keepdims=True)
    quad0 = jnp.sum(mu0_c * eta0_c, axis=0, keepdims=True)                         # (1,1)
    quad1 = jnp.sum(mu1_c * eta1_c, axis=0, keepdims=True)
    zeta0 = -0.5 * (D * LOG_2PI - logdiag0 + quad0)
    zeta1 = -0.5 * (D * LOG_2PI - logdiag1 + quad1)
    z01 = zeta0 + zeta1

    lam_new = cho0 + cho1                                                          # (D,D)
    eta_new_c = eta0_c + eta1_c                                                    # (D,1)

    # var_new = inv(lambda_new) in-kernel (lambda_new is upper triangular with
    # positive diagonal here, so no pivoting is required).
    var_new, _, _ = _gauss_jordan_inverse(lam_new, D)
    var_new_t = _transpose_small(var_new, D)

    # S = triu(var_new) + triu(var_new, 1)^T   (torch.cholesky(., upper=True) reads
    # only the upper triangle of its argument).
    S = jnp.where(rowi <= coli, var_new, var_new_t)

    # var_inv = inv(cho_new^T cho_new) == inv(S).  The Gauss-Jordan pivots of SPD S
    # are exactly diag(cho_new)^2, giving log-det and the score's det for free.
    var_inv, logdet_new, det_new = _gauss_jordan_inverse(S, D)

    # mu_new = var_new @ eta_new, produced directly as a lane-dense (1,D) row.
    mu_new_r = jnp.sum(var_new_t * eta_new_c, axis=0, keepdims=True)               # (1,D)
    eta_new_r = col_to_row(eta_new_c)
    quad_new = jnp.sum(mu_new_r * eta_new_r, axis=1, keepdims=True)                # (1,1)
    zeta_new = -0.5 * (D * LOG_2PI - logdet_new + quad_new)
    scale = z01 - zeta_new                                                         # (1,1)

    # gaussian_score, expanded quadratic form (no (D,D) diff, no D^3 matmul):
    #   q[s] = mu_new[s]^2 * sum(Vinv) - 2 mu_new[s] (1^T Vinv x) + x^T Vinv x
    csum_r = jnp.sum(var_inv, axis=0, keepdims=True)                               # (1,D)
    tot = jnp.sum(csum_r, axis=1, keepdims=True)                                   # (1,1)
    u = jnp.sum(csum_r * x_r, axis=1, keepdims=True)                               # (1,1)
    x_c = row_to_col(x_r)
    xvx = sum_all(var_inv * x_r * x_c)                                             # (1,1)
    q_r = mu_new_r * mu_new_r * tot - 2.0 * mu_new_r * u + xvx                     # (1,D)

    # Fused epilogue: exp(scale) * exp(-q/2) / sqrt(2*pi*det)  (dim == 1 quirk).
    log_scale_part = 0.5 * (LOG_2PI + jnp.log(det_new))                            # (1,1)
    out_ref[...] = jnp.exp(scale - 0.5 * q_r - log_scale_part)                     # (1,D)


@jax.jit
def gaussian_multi_score_forward(mu0, mu1, cho0, cho1, sample):
    D = mu0.shape[0]
    f32 = jnp.float32
    vmem = pl.BlockSpec(memory_space=pltpu.MemorySpace.VMEM)
    out_row = pl.pallas_call(
        _fused_kernel,
        out_shape=jax.ShapeDtypeStruct((1, D), f32),
        in_specs=[vmem, vmem, vmem, vmem, vmem],
        out_specs=vmem,
    )(mu0.reshape(1, D).astype(f32),
      mu1.reshape(1, D).astype(f32),
      sample.reshape(1, D).astype(f32),
      cho0.astype(f32),
      cho1.astype(f32))
    return out_row.reshape(D)


# ---------------------------------------------------------------------------
# Pure-JAX reference (same quirky semantics as the PyTorch module).
# ---------------------------------------------------------------------------
def reference_forward(mu0, mu1, cho0, cho1, sample):
    D = mu0.shape[0]
    lam0, lam1 = cho0, cho1                              # cholesky_solve vs identity
    eta0 = lam0 @ mu0
    eta1 = lam1 @ mu1
    zeta0 = -0.5 * (D * LOG_2PI - jnp.sum(jnp.log(jnp.diag(cho0) ** 2)) + mu0 @ eta0)
    zeta1 = -0.5 * (D * LOG_2PI - jnp.sum(jnp.log(jnp.diag(cho1) ** 2)) + mu1 @ eta1)
    lam_new = lam0 + lam1
    eta_new = eta0 + eta1
    var_new = jnp.linalg.inv(lam_new)
    S = jnp.triu(var_new) + jnp.triu(var_new, 1).T
    cho_new = jnp.linalg.cholesky(S).T
    mu_new = var_new @ eta_new
    zeta_new = -0.5 * (D * LOG_2PI - jnp.sum(jnp.log(jnp.diag(cho_new) ** 2))
                       + mu_new @ eta_new)
    scale = zeta0 + zeta1 - zeta_new
    var = cho_new.T @ cho_new
    var_inv = jnp.linalg.inv(var)
    diff = mu_new[:, None] - sample[None, :]             # (D, D)
    exp_part = -0.5 * jnp.einsum("si,ij,sj->s", diff, var_inv, diff)
    det = jnp.sum(jnp.diag(cho_new) ** 2)
    scale_part = jnp.sqrt((2.0 * np.pi) * det)           # dim == 1 quirk
    sample_score = jnp.exp(exp_part) / scale_part
    return jnp.exp(scale) * sample_score


if __name__ == "__main__":
    D = 8
    key = jax.random.PRNGKey(0)
    k1, k2, k3, k4, k5, k6, k7 = jax.random.split(key, 7)

    mu0 = 0.5 * jax.random.normal(k1, (D,), jnp.float32)
    mu1 = 0.5 * jax.random.normal(k2, (D,), jnp.float32) + 1.0
    # Upper-triangular Cholesky factors with strictly positive diagonals.
    cho0 = (jnp.triu(0.05 * jax.random.normal(k3, (D, D), jnp.float32), k=1)
            + jnp.diag(1.0 + 0.2 * jax.random.uniform(k4, (D,), jnp.float32)))
    cho1 = (jnp.triu(0.05 * jax.random.normal(k5, (D, D), jnp.float32), k=1)
            + jnp.diag(1.0 + 0.2 * jax.random.uniform(k6, (D,), jnp.float32)))
    sample = 0.3 * jax.random.normal(k7, (D,), jnp.float32)

    out = gaussian_multi_score_forward(mu0, mu1, cho0, cho1, sample)
    out = jax.block_until_ready(out)

    ref = reference_forward(mu0, mu1, cho0, cho1, sample)
    assert out.shape == (D,)
    assert bool(jnp.all(jnp.isfinite(out)))
    np.testing.assert_allclose(np.asarray(out), np.asarray(ref),
                               rtol=1e-2, atol=1e-6)
    print("KERNEL_OK")
</pallas_src>

<mosaic_0001>
module attributes {stable_mosaic.version = 11 : i64} {
  func.func @_fused_kernel(%arg0: memref<1x8xf32, #tpu.memory_space<vmem>>, %arg1: memref<1x8xf32, #tpu.memory_space<vmem>>, %arg2: memref<1x8xf32, #tpu.memory_space<vmem>>, %arg3: memref<8x8xf32, #tpu.memory_space<vmem>>, %arg4: memref<8x8xf32, #tpu.memory_space<vmem>>, %arg5: memref<1x8xf32, #tpu.memory_space<vmem>>) attributes {dimension_semantics = [], scalar_prefetch = 0 : i64, scratch_operands = 0 : i64, tpu.core_type = #tpu.core_type<tc>} {
    %0 = tpu.iota {dimensions = array<i32: 0>} : vector<8x8xi32>
    %1 = tpu.iota {dimensions = array<i32: 1>} : vector<8x8xi32>
    %2 = arith.cmpi eq, %0, %1 : vector<8x8xi32>
    %c0 = arith.constant 0 : index
    %c0_0 = arith.constant 0 : index
    %3 = vector.load %arg0[%c0, %c0_0] : memref<1x8xf32, #tpu.memory_space<vmem>>, vector<1x8xf32>
    %c0_1 = arith.constant 0 : index
    %c0_2 = arith.constant 0 : index
    %4 = vector.load %arg1[%c0_1, %c0_2] : memref<1x8xf32, #tpu.memory_space<vmem>>, vector<1x8xf32>
    %c0_3 = arith.constant 0 : index
    %c0_4 = arith.constant 0 : index
    %5 = vector.load %arg2[%c0_3, %c0_4] : memref<1x8xf32, #tpu.memory_space<vmem>>, vector<1x8xf32>
    %c0_5 = arith.constant 0 : index
    %c0_6 = arith.constant 0 : index
    %6 = vector.load %arg3[%c0_5, %c0_6] : memref<8x8xf32, #tpu.memory_space<vmem>>, vector<8x8xf32>
    %c0_7 = arith.constant 0 : index
    %c0_8 = arith.constant 0 : index
    %7 = vector.load %arg4[%c0_7, %c0_8] : memref<8x8xf32, #tpu.memory_space<vmem>>, vector<8x8xf32>
    %cst = arith.constant 0.000000e+00 : f32
    %8 = vector.shape_cast %3 : vector<1x8xf32> to vector<1x8xf32>
    %9 = vector.broadcast %8 : vector<1x8xf32> to vector<8x8xf32>
    %10 = vector.broadcast %cst : f32 to vector<8x8xf32>
    %11 = arith.select %2, %9, %10 : vector<8x8xi1>, vector<8x8xf32>
    %cst_9 = arith.constant dense<0.000000e+00> : vector<8xf32>
    %12 = vector.multi_reduction <add>, %11, %cst_9 [1] : vector<8x8xf32> to vector<8xf32>
    %13 = vector.shape_cast %12 : vector<8xf32> to vector<8x1xf32>
    %cst_10 = arith.constant 0.000000e+00 : f32
    %14 = vector.shape_cast %4 : vector<1x8xf32> to vector<1x8xf32>
    %15 = vector.broadcast %14 : vector<1x8xf32> to vector<8x8xf32>
    %16 = vector.broadcast %cst_10 : f32 to vector<8x8xf32>
    %17 = arith.select %2, %15, %16 : vector<8x8xi1>, vector<8x8xf32>
    %cst_11 = arith.constant dense<0.000000e+00> : vector<8xf32>
    %18 = vector.multi_reduction <add>, %17, %cst_11 [1] : vector<8x8xf32> to vector<8xf32>
    %19 = vector.shape_cast %18 : vector<8xf32> to vector<8x1xf32>
    %20 = vector.broadcast %3 : vector<1x8xf32> to vector<8x8xf32>
    %21 = arith.mulf %6, %20 : vector<8x8xf32>
    %cst_12 = arith.constant dense<0.000000e+00> : vector<8xf32>
    %22 = vector.multi_reduction <add>, %21, %cst_12 [1] : vector<8x8xf32> to vector<8xf32>
    %23 = vector.shape_cast %22 : vector<8xf32> to vector<8x1xf32>
    %24 = vector.broadcast %4 : vector<1x8xf32> to vector<8x8xf32>
    %25 = arith.mulf %7, %24 : vector<8x8xf32>
    %cst_13 = arith.constant dense<0.000000e+00> : vector<8xf32>
    %26 = vector.multi_reduction <add>, %25, %cst_13 [1] : vector<8x8xf32> to vector<8xf32>
    %27 = vector.shape_cast %26 : vector<8xf32> to vector<8x1xf32>
    %cst_14 = arith.constant 0.000000e+00 : f32
    %28 = vector.broadcast %cst_14 : f32 to vector<8x8xf32>
    %29 = arith.select %2, %6, %28 : vector<8x8xi1>, vector<8x8xf32>
    %cst_15 = arith.constant dense<0.000000e+00> : vector<8xf32>
    %30 = vector.multi_reduction <add>, %29, %cst_15 [0] : vector<8x8xf32> to vector<8xf32>
    %31 = vector.shape_cast %30 : vector<8xf32> to vector<1x8xf32>
    %cst_16 = arith.constant 0.000000e+00 : f32
    %32 = vector.broadcast %cst_16 : f32 to vector<8x8xf32>
    %33 = arith.select %2, %7, %32 : vector<8x8xi1>, vector<8x8xf32>
    %cst_17 = arith.constant dense<0.000000e+00> : vector<8xf32>
    %34 = vector.multi_reduction <add>, %33, %cst_17 [0] : vector<8x8xf32> to vector<8xf32>
    %35 = vector.shape_cast %34 : vector<8xf32> to vector<1x8xf32>
    %36 = arith.mulf %31, %31 : vector<1x8xf32>
    %37 = math.log %36 : vector<1x8xf32>
    %cst_18 = arith.constant dense<0.000000e+00> : vector<1xf32>
    %38 = vector.multi_reduction <add>, %37, %cst_18 [1] : vector<1x8xf32> to vector<1xf32>
    %39 = vector.shape_cast %38 : vector<1xf32> to vector<1x1xf32>
    %40 = arith.mulf %35, %35 : vector<1x8xf32>
    %41 = math.log %40 : vector<1x8xf32>
    %cst_19 = arith.constant dense<0.000000e+00> : vector<1xf32>
    %42 = vector.multi_reduction <add>, %41, %cst_19 [1] : vector<1x8xf32> to vector<1xf32>
    %43 = vector.shape_cast %42 : vector<1xf32> to vector<1x1xf32>
    %44 = arith.mulf %13, %23 : vector<8x1xf32>
    %cst_20 = arith.constant dense<0.000000e+00> : vector<1xf32>
    %45 = vector.multi_reduction <add>, %44, %cst_20 [0] : vector<8x1xf32> to vector<1xf32>
    %46 = vector.shape_cast %45 : vector<1xf32> to vector<1x1xf32>
    %47 = arith.mulf %19, %27 : vector<8x1xf32>
    %cst_21 = arith.constant dense<0.000000e+00> : vector<1xf32>
    %48 = vector.multi_reduction <add>, %47, %cst_21 [0] : vector<8x1xf32> to vector<1xf32>
    %49 = vector.shape_cast %48 : vector<1xf32> to vector<1x1xf32>
    %cst_22 = arith.constant 14.7030163 : f32
    %50 = vector.broadcast %cst_22 : f32 to vector<1x1xf32>
    %51 = arith.subf %50, %39 : vector<1x1xf32>
    %52 = arith.addf %51, %46 : vector<1x1xf32>
    %cst_23 = arith.constant -5.000000e-01 : f32
    %53 = vector.broadcast %cst_23 : f32 to vector<1x1xf32>
    %54 = arith.mulf %53, %52 : vector<1x1xf32>
    %cst_24 = arith.constant 14.7030163 : f32
    %55 = vector.broadcast %cst_24 : f32 to vector<1x1xf32>
    %56 = arith.subf %55, %43 : vector<1x1xf32>
    %57 = arith.addf %56, %49 : vector<1x1xf32>
    %cst_25 = arith.constant -5.000000e-01 : f32
    %58 = vector.broadcast %cst_25 : f32 to vector<1x1xf32>
    %59 = arith.mulf %58, %57 : vector<1x1xf32>
    %60 = arith.addf %54, %59 : vector<1x1xf32>
    %61 = arith.addf %6, %7 : vector<8x8xf32>
    %62 = arith.addf %23, %27 : vector<8x1xf32>
    %63 = tpu.iota {dimensions = array<i32: 0>} : vector<8x8xi32>
    %64 = tpu.iota {dimensions = array<i32: 1>} : vector<8x8xi32>
    %65 = tpu.iota {dimensions = array<i32: 1>} : vector<1x8xi32>
    %66 = arith.cmpi eq, %63, %64 : vector<8x8xi32>
    %cst_26 = arith.constant 1.000000e+00 : f32
    %cst_27 = arith.constant 0.000000e+00 : f32
    %67 = vector.broadcast %cst_26 : f32 to vector<8x8xf32>
    %68 = vector.broadcast %cst_27 : f32 to vector<8x8xf32>
    %69 = arith.select %66, %67, %68 : vector<8x8xi1>, vector<8x8xf32>
    %c0_i32 = arith.constant 0 : i32
    %70 = vector.broadcast %c0_i32 : i32 to vector<8x8xi32>
    %71 = arith.cmpi eq, %63, %70 : vector<8x8xi32>
    %72 = vector.broadcast %c0_i32 : i32 to vector<8x8xi32>
    %73 = arith.cmpi eq, %64, %72 : vector<8x8xi32>
    %cst_28 = arith.constant 0.000000e+00 : f32
    %74 = vector.broadcast %cst_28 : f32 to vector<8x8xf32>
    %75 = arith.select %71, %61, %74 : vector<8x8xi1>, vector<8x8xf32>
    %cst_29 = arith.constant dense<0.000000e+00> : vector<8xf32>
    %76 = vector.multi_reduction <add>, %75, %cst_29 [0] : vector<8x8xf32> to vector<8xf32>
    %77 = vector.shape_cast %76 : vector<8xf32> to vector<1x8xf32>
    %cst_30 = arith.constant 0.000000e+00 : f32
    %78 = vector.broadcast %cst_30 : f32 to vector<8x8xf32>
    %79 = arith.select %71, %69, %78 : vector<8x8xi1>, vector<8x8xf32>
    %cst_31 = arith.constant dense<0.000000e+00> : vector<8xf32>
    %80 = vector.multi_reduction <add>, %79, %cst_31 [0] : vector<8x8xf32> to vector<8xf32>
    %81 = vector.shape_cast %80 : vector<8xf32> to vector<1x8xf32>
    %82 = vector.broadcast %c0_i32 : i32 to vector<1x8xi32>
    %83 = arith.cmpi eq, %65, %82 : vector<1x8xi32>
    %cst_32 = arith.constant 0.000000e+00 : f32
    %84 = vector.broadcast %cst_32 : f32 to vector<1x8xf32>
    %85 = arith.select %83, %77, %84 : vector<1x8xi1>, vector<1x8xf32>
    %cst_33 = arith.constant dense<0.000000e+00> : vector<1xf32>
    %86 = vector.multi_reduction <add>, %85, %cst_33 [1] : vector<1x8xf32> to vector<1xf32>
    %87 = vector.shape_cast %86 : vector<1xf32> to vector<1x1xf32>
    %cst_34 = arith.constant 1.000000e+00 : f32
    %88 = vector.broadcast %cst_34 : f32 to vector<1x1xf32>
    %89 = arith.divf %88, %87 : vector<1x1xf32>
    %90 = vector.broadcast %89 : vector<1x1xf32> to vector<1x8xf32>
    %91 = arith.mulf %77, %90 : vector<1x8xf32>
    %92 = vector.broadcast %89 : vector<1x1xf32> to vector<1x8xf32>
    %93 = arith.mulf %81, %92 : vector<1x8xf32>
    %cst_35 = arith.constant 0.000000e+00 : f32
    %94 = vector.broadcast %cst_35 : f32 to vector<8x8xf32>
    %95 = arith.select %73, %61, %94 : vector<8x8xi1>, vector<8x8xf32>
    %cst_36 = arith.constant dense<0.000000e+00> : vector<8xf32>
    %96 = vector.multi_reduction <add>, %95, %cst_36 [1] : vector<8x8xf32> to vector<8xf32>
    %97 = vector.shape_cast %96 : vector<8xf32> to vector<8x1xf32>
    %98 = vector.broadcast %97 : vector<8x1xf32> to vector<8x8xf32>
    %99 = vector.broadcast %91 : vector<1x8xf32> to vector<8x8xf32>
    %100 = arith.mulf %98, %99 : vector<8x8xf32>
    %101 = arith.subf %61, %100 : vector<8x8xf32>
    %102 = vector.shape_cast %91 : vector<1x8xf32> to vector<1x8xf32>
    %103 = vector.broadcast %102 : vector<1x8xf32> to vector<8x8xf32>
    %104 = arith.select %71, %103, %101 : vector<8x8xi1>, vector<8x8xf32>
    %105 = vector.broadcast %97 : vector<8x1xf32> to vector<8x8xf32>
    %106 = vector.broadcast %93 : vector<1x8xf32> to vector<8x8xf32>
    %107 = arith.mulf %105, %106 : vector<8x8xf32>
    %108 = arith.subf %69, %107 : vector<8x8xf32>
    %109 = vector.shape_cast %93 : vector<1x8xf32> to vector<1x8xf32>
    %110 = vector.broadcast %109 : vector<1x8xf32> to vector<8x8xf32>
    %111 = arith.select %71, %110, %108 : vector<8x8xi1>, vector<8x8xf32>
    %c1_i32 = arith.constant 1 : i32
    %112 = vector.broadcast %c1_i32 : i32 to vector<8x8xi32>
    %113 = arith.cmpi eq, %63, %112 : vector<8x8xi32>
    %114 = vector.broadcast %c1_i32 : i32 to vector<8x8xi32>
    %115 = arith.cmpi eq, %64, %114 : vector<8x8xi32>
    %cst_37 = arith.constant 0.000000e+00 : f32
    %116 = vector.broadcast %cst_37 : f32 to vector<8x8xf32>
    %117 = arith.select %113, %104, %116 : vector<8x8xi1>, vector<8x8xf32>
    %cst_38 = arith.constant dense<0.000000e+00> : vector<8xf32>
    %118 = vector.multi_reduction <add>, %117, %cst_38 [0] : vector<8x8xf32> to vector<8xf32>
    %119 = vector.shape_cast %118 : vector<8xf32> to vector<1x8xf32>
    %cst_39 = arith.constant 0.000000e+00 : f32
    %120 = vector.broadcast %cst_39 : f32 to vector<8x8xf32>
    %121 = arith.select %113, %111, %120 : vector<8x8xi1>, vector<8x8xf32>
    %cst_40 = arith.constant dense<0.000000e+00> : vector<8xf32>
    %122 = vector.multi_reduction <add>, %121, %cst_40 [0] : vector<8x8xf32> to vector<8xf32>
    %123 = vector.shape_cast %122 : vector<8xf32> to vector<1x8xf32>
    %124 = vector.broadcast %c1_i32 : i32 to vector<1x8xi32>
    %125 = arith.cmpi eq, %65, %124 : vector<1x8xi32>
    %cst_41 = arith.constant 0.000000e+00 : f32
    %126 = vector.broadcast %cst_41 : f32 to vector<1x8xf32>
    %127 = arith.select %125, %119, %126 : vector<1x8xi1>, vector<1x8xf32>
    %cst_42 = arith.constant dense<0.000000e+00> : vector<1xf32>
    %128 = vector.multi_reduction <add>, %127, %cst_42 [1] : vector<1x8xf32> to vector<1xf32>
    %129 = vector.shape_cast %128 : vector<1xf32> to vector<1x1xf32>
    %cst_43 = arith.constant 1.000000e+00 : f32
    %130 = vector.broadcast %cst_43 : f32 to vector<1x1xf32>
    %131 = arith.divf %130, %129 : vector<1x1xf32>
    %132 = vector.broadcast %131 : vector<1x1xf32> to vector<1x8xf32>
    %133 = arith.mulf %119, %132 : vector<1x8xf32>
    %134 = vector.broadcast %131 : vector<1x1xf32> to vector<1x8xf32>
    %135 = arith.mulf %123, %134 : vector<1x8xf32>
    %cst_44 = arith.constant 0.000000e+00 : f32
    %136 = vector.broadcast %cst_44 : f32 to vector<8x8xf32>
    %137 = arith.select %115, %104, %136 : vector<8x8xi1>, vector<8x8xf32>
    %cst_45 = arith.constant dense<0.000000e+00> : vector<8xf32>
    %138 = vector.multi_reduction <add>, %137, %cst_45 [1] : vector<8x8xf32> to vector<8xf32>
    %139 = vector.shape_cast %138 : vector<8xf32> to vector<8x1xf32>
    %140 = vector.broadcast %139 : vector<8x1xf32> to vector<8x8xf32>
    %141 = vector.broadcast %133 : vector<1x8xf32> to vector<8x8xf32>
    %142 = arith.mulf %140, %141 : vector<8x8xf32>
    %143 = arith.subf %104, %142 : vector<8x8xf32>
    %144 = vector.shape_cast %133 : vector<1x8xf32> to vector<1x8xf32>
    %145 = vector.broadcast %144 : vector<1x8xf32> to vector<8x8xf32>
    %146 = arith.select %113, %145, %143 : vector<8x8xi1>, vector<8x8xf32>
    %147 = vector.broadcast %139 : vector<8x1xf32> to vector<8x8xf32>
    %148 = vector.broadcast %135 : vector<1x8xf32> to vector<8x8xf32>
    %149 = arith.mulf %147, %148 : vector<8x8xf32>
    %150 = arith.subf %111, %149 : vector<8x8xf32>
    %151 = vector.shape_cast %135 : vector<1x8xf32> to vector<1x8xf32>
    %152 = vector.broadcast %151 : vector<1x8xf32> to vector<8x8xf32>
    %153 = arith.select %113, %152, %150 : vector<8x8xi1>, vector<8x8xf32>
    %c2_i32 = arith.constant 2 : i32
    %154 = vector.broadcast %c2_i32 : i32 to vector<8x8xi32>
    %155 = arith.cmpi eq, %63, %154 : vector<8x8xi32>
    %156 = vector.broadcast %c2_i32 : i32 to vector<8x8xi32>
    %157 = arith.cmpi eq, %64, %156 : vector<8x8xi32>
    %cst_46 = arith.constant 0.000000e+00 : f32
    %158 = vector.broadcast %cst_46 : f32 to vector<8x8xf32>
    %159 = arith.select %155, %146, %158 : vector<8x8xi1>, vector<8x8xf32>
    %cst_47 = arith.constant dense<0.000000e+00> : vector<8xf32>
    %160 = vector.multi_reduction <add>, %159, %cst_47 [0] : vector<8x8xf32> to vector<8xf32>
    %161 = vector.shape_cast %160 : vector<8xf32> to vector<1x8xf32>
    %cst_48 = arith.constant 0.000000e+00 : f32
    %162 = vector.broadcast %cst_48 : f32 to vector<8x8xf32>
    %163 = arith.select %155, %153, %162 : vector<8x8xi1>, vector<8x8xf32>
    %cst_49 = arith.constant dense<0.000000e+00> : vector<8xf32>
    %164 = vector.multi_reduction <add>, %163, %cst_49 [0] : vector<8x8xf32> to vector<8xf32>
    %165 = vector.shape_cast %164 : vector<8xf32> to vector<1x8xf32>
    %166 = vector.broadcast %c2_i32 : i32 to vector<1x8xi32>
    %167 = arith.cmpi eq, %65, %166 : vector<1x8xi32>
    %cst_50 = arith.constant 0.000000e+00 : f32
    %168 = vector.broadcast %cst_50 : f32 to vector<1x8xf32>
    %169 = arith.select %167, %161, %168 : vector<1x8xi1>, vector<1x8xf32>
    %cst_51 = arith.constant dense<0.000000e+00> : vector<1xf32>
    %170 = vector.multi_reduction <add>, %169, %cst_51 [1] : vector<1x8xf32> to vector<1xf32>
    %171 = vector.shape_cast %170 : vector<1xf32> to vector<1x1xf32>
    %cst_52 = arith.constant 1.000000e+00 : f32
    %172 = vector.broadcast %cst_52 : f32 to vector<1x1xf32>
    %173 = arith.divf %172, %171 : vector<1x1xf32>
    %174 = vector.broadcast %173 : vector<1x1xf32> to vector<1x8xf32>
    %175 = arith.mulf %161, %174 : vector<1x8xf32>
    %176 = vector.broadcast %173 : vector<1x1xf32> to vector<1x8xf32>
    %177 = arith.mulf %165, %176 : vector<1x8xf32>
    %cst_53 = arith.constant 0.000000e+00 : f32
    %178 = vector.broadcast %cst_53 : f32 to vector<8x8xf32>
    %179 = arith.select %157, %146, %178 : vector<8x8xi1>, vector<8x8xf32>
    %cst_54 = arith.constant dense<0.000000e+00> : vector<8xf32>
    %180 = vector.multi_reduction <add>, %179, %cst_54 [1] : vector<8x8xf32> to vector<8xf32>
    %181 = vector.shape_cast %180 : vector<8xf32> to vector<8x1xf32>
    %182 = vector.broadcast %181 : vector<8x1xf32> to vector<8x8xf32>
    %183 = vector.broadcast %175 : vector<1x8xf32> to vector<8x8xf32>
    %184 = arith.mulf %182, %183 : vector<8x8xf32>
    %185 = arith.subf %146, %184 : vector<8x8xf32>
    %186 = vector.shape_cast %175 : vector<1x8xf32> to vector<1x8xf32>
    %187 = vector.broadcast %186 : vector<1x8xf32> to vector<8x8xf32>
    %188 = arith.select %155, %187, %185 : vector<8x8xi1>, vector<8x8xf32>
    %189 = vector.broadcast %181 : vector<8x1xf32> to vector<8x8xf32>
    %190 = vector.broadcast %177 : vector<1x8xf32> to vector<8x8xf32>
    %191 = arith.mulf %189, %190 : vector<8x8xf32>
    %192 = arith.subf %153, %191 : vector<8x8xf32>
    %193 = vector.shape_cast %177 : vector<1x8xf32> to vector<1x8xf32>
    %194 = vector.broadcast %193 : vector<1x8xf32> to vector<8x8xf32>
    %195 = arith.select %155, %194, %192 : vector<8x8xi1>, vector<8x8xf32>
    %c3_i32 = arith.constant 3 : i32
    %196 = vector.broadcast %c3_i32 : i32 to vector<8x8xi32>
    %197 = arith.cmpi eq, %63, %196 : vector<8x8xi32>
    %198 = vector.broadcast %c3_i32 : i32 to vector<8x8xi32>
    %199 = arith.cmpi eq, %64, %198 : vector<8x8xi32>
    %cst_55 = arith.constant 0.000000e+00 : f32
    %200 = vector.broadcast %cst_55 : f32 to vector<8x8xf32>
    %201 = arith.select %197, %188, %200 : vector<8x8xi1>, vector<8x8xf32>
    %cst_56 = arith.constant dense<0.000000e+00> : vector<8xf32>
    %202 = vector.multi_reduction <add>, %201, %cst_56 [0] : vector<8x8xf32> to vector<8xf32>
    %203 = vector.shape_cast %202 : vector<8xf32> to vector<1x8xf32>
    %cst_57 = arith.constant 0.000000e+00 : f32
    %204 = vector.broadcast %cst_57 : f32 to vector<8x8xf32>
    %205 = arith.select %197, %195, %204 : vector<8x8xi1>, vector<8x8xf32>
    %cst_58 = arith.constant dense<0.000000e+00> : vector<8xf32>
    %206 = vector.multi_reduction <add>, %205, %cst_58 [0] : vector<8x8xf32> to vector<8xf32>
    %207 = vector.shape_cast %206 : vector<8xf32> to vector<1x8xf32>
    %208 = vector.broadcast %c3_i32 : i32 to vector<1x8xi32>
    %209 = arith.cmpi eq, %65, %208 : vector<1x8xi32>
    %cst_59 = arith.constant 0.000000e+00 : f32
    %210 = vector.broadcast %cst_59 : f32 to vector<1x8xf32>
    %211 = arith.select %209, %203, %210 : vector<1x8xi1>, vector<1x8xf32>
    %cst_60 = arith.constant dense<0.000000e+00> : vector<1xf32>
    %212 = vector.multi_reduction <add>, %211, %cst_60 [1] : vector<1x8xf32> to vector<1xf32>
    %213 = vector.shape_cast %212 : vector<1xf32> to vector<1x1xf32>
    %cst_61 = arith.constant 1.000000e+00 : f32
    %214 = vector.broadcast %cst_61 : f32 to vector<1x1xf32>
    %215 = arith.divf %214, %213 : vector<1x1xf32>
    %216 = vector.broadcast %215 : vector<1x1xf32> to vector<1x8xf32>
    %217 = arith.mulf %203, %216 : vector<1x8xf32>
    %218 = vector.broadcast %215 : vector<1x1xf32> to vector<1x8xf32>
    %219 = arith.mulf %207, %218 : vector<1x8xf32>
    %cst_62 = arith.constant 0.000000e+00 : f32
    %220 = vector.broadcast %cst_62 : f32 to vector<8x8xf32>
    %221 = arith.select %199, %188, %220 : vector<8x8xi1>, vector<8x8xf32>
    %cst_63 = arith.constant dense<0.000000e+00> : vector<8xf32>
    %222 = vector.multi_reduction <add>, %221, %cst_63 [1] : vector<8x8xf32> to vector<8xf32>
    %223 = vector.shape_cast %222 : vector<8xf32> to vector<8x1xf32>
    %224 = vector.broadcast %223 : vector<8x1xf32> to vector<8x8xf32>
    %225 = vector.broadcast %217 : vector<1x8xf32> to vector<8x8xf32>
    %226 = arith.mulf %224, %225 : vector<8x8xf32>
    %227 = arith.subf %188, %226 : vector<8x8xf32>
    %228 = vector.shape_cast %217 : vector<1x8xf32> to vector<1x8xf32>
    %229 = vector.broadcast %228 : vector<1x8xf32> to vector<8x8xf32>
    %230 = arith.select %197, %229, %227 : vector<8x8xi1>, vector<8x8xf32>
    %231 = vector.broadcast %223 : vector<8x1xf32> to vector<8x8xf32>
    %232 = vector.broadcast %219 : vector<1x8xf32> to vector<8x8xf32>
    %233 = arith.mulf %231, %232 : vector<8x8xf32>
    %234 = arith.subf %195, %233 : vector<8x8xf32>
    %235 = vector.shape_cast %219 : vector<1x8xf32> to vector<1x8xf32>
    %236 = vector.broadcast %235 : vector<1x8xf32> to vector<8x8xf32>
    %237 = arith.select %197, %236, %234 : vector<8x8xi1>, vector<8x8xf32>
    %c4_i32 = arith.constant 4 : i32
    %238 = vector.broadcast %c4_i32 : i32 to vector<8x8xi32>
    %239 = arith.cmpi eq, %63, %238 : vector<8x8xi32>
    %240 = vector.broadcast %c4_i32 : i32 to vector<8x8xi32>
    %241 = arith.cmpi eq, %64, %240 : vector<8x8xi32>
    %cst_64 = arith.constant 0.000000e+00 : f32
    %242 = vector.broadcast %cst_64 : f32 to vector<8x8xf32>
    %243 = arith.select %239, %230, %242 : vector<8x8xi1>, vector<8x8xf32>
    %cst_65 = arith.constant dense<0.000000e+00> : vector<8xf32>
    %244 = vector.multi_reduction <add>, %243, %cst_65 [0] : vector<8x8xf32> to vector<8xf32>
    %245 = vector.shape_cast %244 : vector<8xf32> to vector<1x8xf32>
    %cst_66 = arith.constant 0.000000e+00 : f32
    %246 = vector.broadcast %cst_66 : f32 to vector<8x8xf32>
    %247 = arith.select %239, %237, %246 : vector<8x8xi1>, vector<8x8xf32>
    %cst_67 = arith.constant dense<0.000000e+00> : vector<8xf32>
    %248 = vector.multi_reduction <add>, %247, %cst_67 [0] : vector<8x8xf32> to vector<8xf32>
    %249 = vector.shape_cast %248 : vector<8xf32> to vector<1x8xf32>
    %250 = vector.broadcast %c4_i32 : i32 to vector<1x8xi32>
    %251 = arith.cmpi eq, %65, %250 : vector<1x8xi32>
    %cst_68 = arith.constant 0.000000e+00 : f32
    %252 = vector.broadcast %cst_68 : f32 to vector<1x8xf32>
    %253 = arith.select %251, %245, %252 : vector<1x8xi1>, vector<1x8xf32>
    %cst_69 = arith.constant dense<0.000000e+00> : vector<1xf32>
    %254 = vector.multi_reduction <add>, %253, %cst_69 [1] : vector<1x8xf32> to vector<1xf32>
    %255 = vector.shape_cast %254 : vector<1xf32> to vector<1x1xf32>
    %cst_70 = arith.constant 1.000000e+00 : f32
    %256 = vector.broadcast %cst_70 : f32 to vector<1x1xf32>
    %257 = arith.divf %256, %255 : vector<1x1xf32>
    %258 = vector.broadcast %257 : vector<1x1xf32> to vector<1x8xf32>
    %259 = arith.mulf %245, %258 : vector<1x8xf32>
    %260 = vector.broadcast %257 : vector<1x1xf32> to vector<1x8xf32>
    %261 = arith.mulf %249, %260 : vector<1x8xf32>
    %cst_71 = arith.constant 0.000000e+00 : f32
    %262 = vector.broadcast %cst_71 : f32 to vector<8x8xf32>
    %263 = arith.select %241, %230, %262 : vector<8x8xi1>, vector<8x8xf32>
    %cst_72 = arith.constant dense<0.000000e+00> : vector<8xf32>
    %264 = vector.multi_reduction <add>, %263, %cst_72 [1] : vector<8x8xf32> to vector<8xf32>
    %265 = vector.shape_cast %264 : vector<8xf32> to vector<8x1xf32>
    %266 = vector.broadcast %265 : vector<8x1xf32> to vector<8x8xf32>
    %267 = vector.broadcast %259 : vector<1x8xf32> to vector<8x8xf32>
    %268 = arith.mulf %266, %267 : vector<8x8xf32>
    %269 = arith.subf %230, %268 : vector<8x8xf32>
    %270 = vector.shape_cast %259 : vector<1x8xf32> to vector<1x8xf32>
    %271 = vector.broadcast %270 : vector<1x8xf32> to vector<8x8xf32>
    %272 = arith.select %239, %271, %269 : vector<8x8xi1>, vector<8x8xf32>
    %273 = vector.broadcast %265 : vector<8x1xf32> to vector<8x8xf32>
    %274 = vector.broadcast %261 : vector<1x8xf32> to vector<8x8xf32>
    %275 = arith.mulf %273, %274 : vector<8x8xf32>
    %276 = arith.subf %237, %275 : vector<8x8xf32>
    %277 = vector.shape_cast %261 : vector<1x8xf32> to vector<1x8xf32>
    %278 = vector.broadcast %277 : vector<1x8xf32> to vector<8x8xf32>
    %279 = arith.select %239, %278, %276 : vector<8x8xi1>, vector<8x8xf32>
    %c5_i32 = arith.constant 5 : i32
    %280 = vector.broadcast %c5_i32 : i32 to vector<8x8xi32>
    %281 = arith.cmpi eq, %63, %280 : vector<8x8xi32>
    %282 = vector.broadcast %c5_i32 : i32 to vector<8x8xi32>
    %283 = arith.cmpi eq, %64, %282 : vector<8x8xi32>
    %cst_73 = arith.constant 0.000000e+00 : f32
    %284 = vector.broadcast %cst_73 : f32 to vector<8x8xf32>
    %285 = arith.select %281, %272, %284 : vector<8x8xi1>, vector<8x8xf32>
    %cst_74 = arith.constant dense<0.000000e+00> : vector<8xf32>
    %286 = vector.multi_reduction <add>, %285, %cst_74 [0] : vector<8x8xf32> to vector<8xf32>
    %287 = vector.shape_cast %286 : vector<8xf32> to vector<1x8xf32>
    %cst_75 = arith.constant 0.000000e+00 : f32
    %288 = vector.broadcast %cst_75 : f32 to vector<8x8xf32>
    %289 = arith.select %281, %279, %288 : vector<8x8xi1>, vector<8x8xf32>
    %cst_76 = arith.constant dense<0.000000e+00> : vector<8xf32>
    %290 = vector.multi_reduction <add>, %289, %cst_76 [0] : vector<8x8xf32> to vector<8xf32>
    %291 = vector.shape_cast %290 : vector<8xf32> to vector<1x8xf32>
    %292 = vector.broadcast %c5_i32 : i32 to vector<1x8xi32>
    %293 = arith.cmpi eq, %65, %292 : vector<1x8xi32>
    %cst_77 = arith.constant 0.000000e+00 : f32
    %294 = vector.broadcast %cst_77 : f32 to vector<1x8xf32>
    %295 = arith.select %293, %287, %294 : vector<1x8xi1>, vector<1x8xf32>
    %cst_78 = arith.constant dense<0.000000e+00> : vector<1xf32>
    %296 = vector.multi_reduction <add>, %295, %cst_78 [1] : vector<1x8xf32> to vector<1xf32>
    %297 = vector.shape_cast %296 : vector<1xf32> to vector<1x1xf32>
    %cst_79 = arith.constant 1.000000e+00 : f32
    %298 = vector.broadcast %cst_79 : f32 to vector<1x1xf32>
    %299 = arith.divf %298, %297 : vector<1x1xf32>
    %300 = vector.broadcast %299 : vector<1x1xf32> to vector<1x8xf32>
    %301 = arith.mulf %287, %300 : vector<1x8xf32>
    %302 = vector.broadcast %299 : vector<1x1xf32> to vector<1x8xf32>
    %303 = arith.mulf %291, %302 : vector<1x8xf32>
    %cst_80 = arith.constant 0.000000e+00 : f32
    %304 = vector.broadcast %cst_80 : f32 to vector<8x8xf32>
    %305 = arith.select %283, %272, %304 : vector<8x8xi1>, vector<8x8xf32>
    %cst_81 = arith.constant dense<0.000000e+00> : vector<8xf32>
    %306 = vector.multi_reduction <add>, %305, %cst_81 [1] : vector<8x8xf32> to vector<8xf32>
    %307 = vector.shape_cast %306 : vector<8xf32> to vector<8x1xf32>
    %308 = vector.broadcast %307 : vector<8x1xf32> to vector<8x8xf32>
    %309 = vector.broadcast %301 : vector<1x8xf32> to vector<8x8xf32>
    %310 = arith.mulf %308, %309 : vector<8x8xf32>
    %311 = arith.subf %272, %310 : vector<8x8xf32>
    %312 = vector.shape_cast %301 : vector<1x8xf32> to vector<1x8xf32>
    %313 = vector.broadcast %312 : vector<1x8xf32> to vector<8x8xf32>
    %314 = arith.select %281, %313, %311 : vector<8x8xi1>, vector<8x8xf32>
    %315 = vector.broadcast %307 : vector<8x1xf32> to vector<8x8xf32>
    %316 = vector.broadcast %303 : vector<1x8xf32> to vector<8x8xf32>
    %317 = arith.mulf %315, %316 : vector<8x8xf32>
    %318 = arith.subf %279, %317 : vector<8x8xf32>
    %319 = vector.shape_cast %303 : vector<1x8xf32> to vector<1x8xf32>
    %320 = vector.broadcast %319 : vector<1x8xf32> to vector<8x8xf32>
    %321 = arith.select %281, %320, %318 : vector<8x8xi1>, vector<8x8xf32>
    %c6_i32 = arith.constant 6 : i32
    %322 = vector.broadcast %c6_i32 : i32 to vector<8x8xi32>
    %323 = arith.cmpi eq, %63, %322 : vector<8x8xi32>
    %324 = vector.broadcast %c6_i32 : i32 to vector<8x8xi32>
    %325 = arith.cmpi eq, %64, %324 : vector<8x8xi32>
    %cst_82 = arith.constant 0.000000e+00 : f32
    %326 = vector.broadcast %cst_82 : f32 to vector<8x8xf32>
    %327 = arith.select %323, %314, %326 : vector<8x8xi1>, vector<8x8xf32>
    %cst_83 = arith.constant dense<0.000000e+00> : vector<8xf32>
    %328 = vector.multi_reduction <add>, %327, %cst_83 [0] : vector<8x8xf32> to vector<8xf32>
    %329 = vector.shape_cast %328 : vector<8xf32> to vector<1x8xf32>
    %cst_84 = arith.constant 0.000000e+00 : f32
    %330 = vector.broadcast %cst_84 : f32 to vector<8x8xf32>
    %331 = arith.select %323, %321, %330 : vector<8x8xi1>, vector<8x8xf32>
    %cst_85 = arith.constant dense<0.000000e+00> : vector<8xf32>
    %332 = vector.multi_reduction <add>, %331, %cst_85 [0] : vector<8x8xf32> to vector<8xf32>
    %333 = vector.shape_cast %332 : vector<8xf32> to vector<1x8xf32>
    %334 = vector.broadcast %c6_i32 : i32 to vector<1x8xi32>
    %335 = arith.cmpi eq, %65, %334 : vector<1x8xi32>
    %cst_86 = arith.constant 0.000000e+00 : f32
    %336 = vector.broadcast %cst_86 : f32 to vector<1x8xf32>
    %337 = arith.select %335, %329, %336 : vector<1x8xi1>, vector<1x8xf32>
    %cst_87 = arith.constant dense<0.000000e+00> : vector<1xf32>
    %338 = vector.multi_reduction <add>, %337, %cst_87 [1] : vector<1x8xf32> to vector<1xf32>
    %339 = vector.shape_cast %338 : vector<1xf32> to vector<1x1xf32>
    %cst_88 = arith.constant 1.000000e+00 : f32
    %340 = vector.broadcast %cst_88 : f32 to vector<1x1xf32>
    %341 = arith.divf %340, %339 : vector<1x1xf32>
    %342 = vector.broadcast %341 : vector<1x1xf32> to vector<1x8xf32>
    %343 = arith.mulf %329, %342 : vector<1x8xf32>
    %344 = vector.broadcast %341 : vector<1x1xf32> to vector<1x8xf32>
    %345 = arith.mulf %333, %344 : vector<1x8xf32>
    %cst_89 = arith.constant 0.000000e+00 : f32
    %346 = vector.broadcast %cst_89 : f32 to vector<8x8xf32>
    %347 = arith.select %325, %314, %346 : vector<8x8xi1>, vector<8x8xf32>
    %cst_90 = arith.constant dense<0.000000e+00> : vector<8xf32>
    %348 = vector.multi_reduction <add>, %347, %cst_90 [1] : vector<8x8xf32> to vector<8xf32>
    %349 = vector.shape_cast %348 : vector<8xf32> to vector<8x1xf32>
    %350 = vector.broadcast %349 : vector<8x1xf32> to vector<8x8xf32>
    %351 = vector.broadcast %343 : vector<1x8xf32> to vector<8x8xf32>
    %352 = arith.mulf %350, %351 : vector<8x8xf32>
    %353 = arith.subf %314, %352 : vector<8x8xf32>
    %354 = vector.shape_cast %343 : vector<1x8xf32> to vector<1x8xf32>
    %355 = vector.broadcast %354 : vector<1x8xf32> to vector<8x8xf32>
    %356 = arith.select %323, %355, %353 : vector<8x8xi1>, vector<8x8xf32>
    %357 = vector.broadcast %349 : vector<8x1xf32> to vector<8x8xf32>
    %358 = vector.broadcast %345 : vector<1x8xf32> to vector<8x8xf32>
    %359 = arith.mulf %357, %358 : vector<8x8xf32>
    %360 = arith.subf %321, %359 : vector<8x8xf32>
    %361 = vector.shape_cast %345 : vector<1x8xf32> to vector<1x8xf32>
    %362 = vector.broadcast %361 : vector<1x8xf32> to vector<8x8xf32>
    %363 = arith.select %323, %362, %360 : vector<8x8xi1>, vector<8x8xf32>
    %c7_i32 = arith.constant 7 : i32
    %364 = vector.broadcast %c7_i32 : i32 to vector<8x8xi32>
    %365 = arith.cmpi eq, %63, %364 : vector<8x8xi32>
    %366 = vector.broadcast %c7_i32 : i32 to vector<8x8xi32>
    %367 = arith.cmpi eq, %64, %366 : vector<8x8xi32>
    %cst_91 = arith.constant 0.000000e+00 : f32
    %368 = vector.broadcast %cst_91 : f32 to vector<8x8xf32>
    %369 = arith.select %365, %356, %368 : vector<8x8xi1>, vector<8x8xf32>
    %cst_92 = arith.constant dense<0.000000e+00> : vector<8xf32>
    %370 = vector.multi_reduction <add>, %369, %cst_92 [0] : vector<8x8xf32> to vector<8xf32>
    %371 = vector.shape_cast %370 : vector<8xf32> to vector<1x8xf32>
    %cst_93 = arith.constant 0.000000e+00 : f32
    %372 = vector.broadcast %cst_93 : f32 to vector<8x8xf32>
    %373 = arith.select %365, %363, %372 : vector<8x8xi1>, vector<8x8xf32>
    %cst_94 = arith.constant dense<0.000000e+00> : vector<8xf32>
    %374 = vector.multi_reduction <add>, %373, %cst_94 [0] : vector<8x8xf32> to vector<8xf32>
    %375 = vector.shape_cast %374 : vector<8xf32> to vector<1x8xf32>
    %376 = vector.broadcast %c7_i32 : i32 to vector<1x8xi32>
    %377 = arith.cmpi eq, %65, %376 : vector<1x8xi32>
    %cst_95 = arith.constant 0.000000e+00 : f32
    %378 = vector.broadcast %cst_95 : f32 to vector<1x8xf32>
    %379 = arith.select %377, %371, %378 : vector<1x8xi1>, vector<1x8xf32>
    %cst_96 = arith.constant dense<0.000000e+00> : vector<1xf32>
    %380 = vector.multi_reduction <add>, %379, %cst_96 [1] : vector<1x8xf32> to vector<1xf32>
    %381 = vector.shape_cast %380 : vector<1xf32> to vector<1x1xf32>
    %cst_97 = arith.constant 1.000000e+00 : f32
    %382 = vector.broadcast %cst_97 : f32 to vector<1x1xf32>
    %383 = arith.divf %382, %381 : vector<1x1xf32>
    %384 = vector.broadcast %383 : vector<1x1xf32> to vector<1x8xf32>
    %385 = arith.mulf %371, %384 : vector<1x8xf32>
    %386 = vector.broadcast %383 : vector<1x1xf32> to vector<1x8xf32>
    %387 = arith.mulf %375, %386 : vector<1x8xf32>
    %cst_98 = arith.constant 0.000000e+00 : f32
    %388 = vector.broadcast %cst_98 : f32 to vector<8x8xf32>
    %389 = arith.select %367, %356, %388 : vector<8x8xi1>, vector<8x8xf32>
    %cst_99 = arith.constant dense<0.000000e+00> : vector<8xf32>
    %390 = vector.multi_reduction <add>, %389, %cst_99 [1] : vector<8x8xf32> to vector<8xf32>
    %391 = vector.shape_cast %390 : vector<8xf32> to vector<8x1xf32>
    %392 = vector.broadcast %391 : vector<8x1xf32> to vector<8x8xf32>
    %393 = vector.broadcast %385 : vector<1x8xf32> to vector<8x8xf32>
    %394 = arith.mulf %392, %393 : vector<8x8xf32>
    %395 = arith.subf %356, %394 : vector<8x8xf32>
    %396 = vector.shape_cast %385 : vector<1x8xf32> to vector<1x8xf32>
    %397 = vector.broadcast %396 : vector<1x8xf32> to vector<8x8xf32>
    %398 = arith.select %365, %397, %395 : vector<8x8xi1>, vector<8x8xf32>
    %399 = vector.broadcast %391 : vector<8x1xf32> to vector<8x8xf32>
    %400 = vector.broadcast %387 : vector<1x8xf32> to vector<8x8xf32>
    %401 = arith.mulf %399, %400 : vector<8x8xf32>
    %402 = arith.subf %363, %401 : vector<8x8xf32>
    %403 = vector.shape_cast %387 : vector<1x8xf32> to vector<1x8xf32>
    %404 = vector.broadcast %403 : vector<1x8xf32> to vector<8x8xf32>
    %405 = arith.select %365, %404, %402 : vector<8x8xi1>, vector<8x8xf32>
    %c8_i32 = arith.constant 8 : i32
    %406 = tpu.iota {dimensions = array<i32: 0>} : vector<8x8xi32>
    %407 = tpu.iota {dimensions = array<i32: 1>} : vector<8x8xi32>
    %408 = arith.cmpi eq, %406, %407 : vector<8x8xi32>
    %cst_100 = arith.constant 0.000000e+00 : f32
    %409 = vector.broadcast %cst_100 : f32 to vector<8x8xf32>
    %c0_i32_101 = arith.constant 0 : i32
    %410 = vector.broadcast %c0_i32_101 : i32 to vector<8x8xi32>
    %411 = arith.cmpi eq, %407, %410 : vector<8x8xi32>
    %cst_102 = arith.constant 0.000000e+00 : f32
    %412 = vector.broadcast %cst_102 : f32 to vector<8x8xf32>
    %413 = arith.select %411, %405, %412 : vector<8x8xi1>, vector<8x8xf32>
    %cst_103 = arith.constant dense<0.000000e+00> : vector<8xf32>
    %414 = vector.multi_reduction <add>, %413, %cst_103 [1] : vector<8x8xf32> to vector<8xf32>
    %415 = vector.shape_cast %414 : vector<8xf32> to vector<8x1xf32>
    %cst_104 = arith.constant 0.000000e+00 : f32
    %416 = vector.shape_cast %415 : vector<8x1xf32> to vector<8x1xf32>
    %417 = vector.broadcast %416 : vector<8x1xf32> to vector<8x8xf32>
    %418 = vector.broadcast %cst_104 : f32 to vector<8x8xf32>
    %419 = arith.select %408, %417, %418 : vector<8x8xi1>, vector<8x8xf32>
    %cst_105 = arith.constant dense<0.000000e+00> : vector<8xf32>
    %420 = vector.multi_reduction <add>, %419, %cst_105 [0] : vector<8x8xf32> to vector<8xf32>
    %421 = vector.shape_cast %420 : vector<8xf32> to vector<1x8xf32>
    %422 = vector.broadcast %c0_i32_101 : i32 to vector<8x8xi32>
    %423 = arith.cmpi eq, %406, %422 : vector<8x8xi32>
    %424 = vector.shape_cast %421 : vector<1x8xf32> to vector<1x8xf32>
    %425 = vector.broadcast %424 : vector<1x8xf32> to vector<8x8xf32>
    %426 = arith.select %423, %425, %409 : vector<8x8xi1>, vector<8x8xf32>
    %c1_i32_106 = arith.constant 1 : i32
    %427 = vector.broadcast %c1_i32_106 : i32 to vector<8x8xi32>
    %428 = arith.cmpi eq, %407, %427 : vector<8x8xi32>
    %cst_107 = arith.constant 0.000000e+00 : f32
    %429 = vector.broadcast %cst_107 : f32 to vector<8x8xf32>
    %430 = arith.select %428, %405, %429 : vector<8x8xi1>, vector<8x8xf32>
    %cst_108 = arith.constant dense<0.000000e+00> : vector<8xf32>
    %431 = vector.multi_reduction <add>, %430, %cst_108 [1] : vector<8x8xf32> to vector<8xf32>
    %432 = vector.shape_cast %431 : vector<8xf32> to vector<8x1xf32>
    %cst_109 = arith.constant 0.000000e+00 : f32
    %433 = vector.shape_cast %432 : vector<8x1xf32> to vector<8x1xf32>
    %434 = vector.broadcast %433 : vector<8x1xf32> to vector<8x8xf32>
    %435 = vector.broadcast %cst_109 : f32 to vector<8x8xf32>
    %436 = arith.select %408, %434, %435 : vector<8x8xi1>, vector<8x8xf32>
    %cst_110 = arith.constant dense<0.000000e+00> : vector<8xf32>
    %437 = vector.multi_reduction <add>, %436, %cst_110 [0] : vector<8x8xf32> to vector<8xf32>
    %438 = vector.shape_cast %437 : vector<8xf32> to vector<1x8xf32>
    %439 = vector.broadcast %c1_i32_106 : i32 to vector<8x8xi32>
    %440 = arith.cmpi eq, %406, %439 : vector<8x8xi32>
    %441 = vector.shape_cast %438 : vector<1x8xf32> to vector<1x8xf32>
    %442 = vector.broadcast %441 : vector<1x8xf32> to vector<8x8xf32>
    %443 = arith.select %440, %442, %426 : vector<8x8xi1>, vector<8x8xf32>
    %c2_i32_111 = arith.constant 2 : i32
    %444 = vector.broadcast %c2_i32_111 : i32 to vector<8x8xi32>
    %445 = arith.cmpi eq, %407, %444 : vector<8x8xi32>
    %cst_112 = arith.constant 0.000000e+00 : f32
    %446 = vector.broadcast %cst_112 : f32 to vector<8x8xf32>
    %447 = arith.select %445, %405, %446 : vector<8x8xi1>, vector<8x8xf32>
    %cst_113 = arith.constant dense<0.000000e+00> : vector<8xf32>
    %448 = vector.multi_reduction <add>, %447, %cst_113 [1] : vector<8x8xf32> to vector<8xf32>
    %449 = vector.shape_cast %448 : vector<8xf32> to vector<8x1xf32>
    %cst_114 = arith.constant 0.000000e+00 : f32
    %450 = vector.shape_cast %449 : vector<8x1xf32> to vector<8x1xf32>
    %451 = vector.broadcast %450 : vector<8x1xf32> to vector<8x8xf32>
    %452 = vector.broadcast %cst_114 : f32 to vector<8x8xf32>
    %453 = arith.select %408, %451, %452 : vector<8x8xi1>, vector<8x8xf32>
    %cst_115 = arith.constant dense<0.000000e+00> : vector<8xf32>
    %454 = vector.multi_reduction <add>, %453, %cst_115 [0] : vector<8x8xf32> to vector<8xf32>
    %455 = vector.shape_cast %454 : vector<8xf32> to vector<1x8xf32>
    %456 = vector.broadcast %c2_i32_111 : i32 to vector<8x8xi32>
    %457 = arith.cmpi eq, %406, %456 : vector<8x8xi32>
    %458 = vector.shape_cast %455 : vector<1x8xf32> to vector<1x8xf32>
    %459 = vector.broadcast %458 : vector<1x8xf32> to vector<8x8xf32>
    %460 = arith.select %457, %459, %443 : vector<8x8xi1>, vector<8x8xf32>
    %c3_i32_116 = arith.constant 3 : i32
    %461 = vector.broadcast %c3_i32_116 : i32 to vector<8x8xi32>
    %462 = arith.cmpi eq, %407, %461 : vector<8x8xi32>
    %cst_117 = arith.constant 0.000000e+00 : f32
    %463 = vector.broadcast %cst_117 : f32 to vector<8x8xf32>
    %464 = arith.select %462, %405, %463 : vector<8x8xi1>, vector<8x8xf32>
    %cst_118 = arith.constant dense<0.000000e+00> : vector<8xf32>
    %465 = vector.multi_reduction <add>, %464, %cst_118 [1] : vector<8x8xf32> to vector<8xf32>
    %466 = vector.shape_cast %465 : vector<8xf32> to vector<8x1xf32>
    %cst_119 = arith.constant 0.000000e+00 : f32
    %467 = vector.shape_cast %466 : vector<8x1xf32> to vector<8x1xf32>
    %468 = vector.broadcast %467 : vector<8x1xf32> to vector<8x8xf32>
    %469 = vector.broadcast %cst_119 : f32 to vector<8x8xf32>
    %470 = arith.select %408, %468, %469 : vector<8x8xi1>, vector<8x8xf32>
    %cst_120 = arith.constant dense<0.000000e+00> : vector<8xf32>
    %471 = vector.multi_reduction <add>, %470, %cst_120 [0] : vector<8x8xf32> to vector<8xf32>
    %472 = vector.shape_cast %471 : vector<8xf32> to vector<1x8xf32>
    %473 = vector.broadcast %c3_i32_116 : i32 to vector<8x8xi32>
    %474 = arith.cmpi eq, %406, %473 : vector<8x8xi32>
    %475 = vector.shape_cast %472 : vector<1x8xf32> to vector<1x8xf32>
    %476 = vector.broadcast %475 : vector<1x8xf32> to vector<8x8xf32>
    %477 = arith.select %474, %476, %460 : vector<8x8xi1>, vector<8x8xf32>
    %c4_i32_121 = arith.constant 4 : i32
    %478 = vector.broadcast %c4_i32_121 : i32 to vector<8x8xi32>
    %479 = arith.cmpi eq, %407, %478 : vector<8x8xi32>
    %cst_122 = arith.constant 0.000000e+00 : f32
    %480 = vector.broadcast %cst_122 : f32 to vector<8x8xf32>
    %481 = arith.select %479, %405, %480 : vector<8x8xi1>, vector<8x8xf32>
    %cst_123 = arith.constant dense<0.000000e+00> : vector<8xf32>
    %482 = vector.multi_reduction <add>, %481, %cst_123 [1] : vector<8x8xf32> to vector<8xf32>
    %483 = vector.shape_cast %482 : vector<8xf32> to vector<8x1xf32>
    %cst_124 = arith.constant 0.000000e+00 : f32
    %484 = vector.shape_cast %483 : vector<8x1xf32> to vector<8x1xf32>
    %485 = vector.broadcast %484 : vector<8x1xf32> to vector<8x8xf32>
    %486 = vector.broadcast %cst_124 : f32 to vector<8x8xf32>
    %487 = arith.select %408, %485, %486 : vector<8x8xi1>, vector<8x8xf32>
    %cst_125 = arith.constant dense<0.000000e+00> : vector<8xf32>
    %488 = vector.multi_reduction <add>, %487, %cst_125 [0] : vector<8x8xf32> to vector<8xf32>
    %489 = vector.shape_cast %488 : vector<8xf32> to vector<1x8xf32>
    %490 = vector.broadcast %c4_i32_121 : i32 to vector<8x8xi32>
    %491 = arith.cmpi eq, %406, %490 : vector<8x8xi32>
    %492 = vector.shape_cast %489 : vector<1x8xf32> to vector<1x8xf32>
    %493 = vector.broadcast %492 : vector<1x8xf32> to vector<8x8xf32>
    %494 = arith.select %491, %493, %477 : vector<8x8xi1>, vector<8x8xf32>
    %c5_i32_126 = arith.constant 5 : i32
    %495 = vector.broadcast %c5_i32_126 : i32 to vector<8x8xi32>
    %496 = arith.cmpi eq, %407, %495 : vector<8x8xi32>
    %cst_127 = arith.constant 0.000000e+00 : f32
    %497 = vector.broadcast %cst_127 : f32 to vector<8x8xf32>
    %498 = arith.select %496, %405, %497 : vector<8x8xi1>, vector<8x8xf32>
    %cst_128 = arith.constant dense<0.000000e+00> : vector<8xf32>
    %499 = vector.multi_reduction <add>, %498, %cst_128 [1] : vector<8x8xf32> to vector<8xf32>
    %500 = vector.shape_cast %499 : vector<8xf32> to vector<8x1xf32>
    %cst_129 = arith.constant 0.000000e+00 : f32
    %501 = vector.shape_cast %500 : vector<8x1xf32> to vector<8x1xf32>
    %502 = vector.broadcast %501 : vector<8x1xf32> to vector<8x8xf32>
    %503 = vector.broadcast %cst_129 : f32 to vector<8x8xf32>
    %504 = arith.select %408, %502, %503 : vector<8x8xi1>, vector<8x8xf32>
    %cst_130 = arith.constant dense<0.000000e+00> : vector<8xf32>
    %505 = vector.multi_reduction <add>, %504, %cst_130 [0] : vector<8x8xf32> to vector<8xf32>
    %506 = vector.shape_cast %505 : vector<8xf32> to vector<1x8xf32>
    %507 = vector.broadcast %c5_i32_126 : i32 to vector<8x8xi32>
    %508 = arith.cmpi eq, %406, %507 : vector<8x8xi32>
    %509 = vector.shape_cast %506 : vector<1x8xf32> to vector<1x8xf32>
    %510 = vector.broadcast %509 : vector<1x8xf32> to vector<8x8xf32>
    %511 = arith.select %508, %510, %494 : vector<8x8xi1>, vector<8x8xf32>
    %c6_i32_131 = arith.constant 6 : i32
    %512 = vector.broadcast %c6_i32_131 : i32 to vector<8x8xi32>
    %513 = arith.cmpi eq, %407, %512 : vector<8x8xi32>
    %cst_132 = arith.constant 0.000000e+00 : f32
    %514 = vector.broadcast %cst_132 : f32 to vector<8x8xf32>
    %515 = arith.select %513, %405, %514 : vector<8x8xi1>, vector<8x8xf32>
    %cst_133 = arith.constant dense<0.000000e+00> : vector<8xf32>
    %516 = vector.multi_reduction <add>, %515, %cst_133 [1] : vector<8x8xf32> to vector<8xf32>
    %517 = vector.shape_cast %516 : vector<8xf32> to vector<8x1xf32>
    %cst_134 = arith.constant 0.000000e+00 : f32
    %518 = vector.shape_cast %517 : vector<8x1xf32> to vector<8x1xf32>
    %519 = vector.broadcast %518 : vector<8x1xf32> to vector<8x8xf32>
    %520 = vector.broadcast %cst_134 : f32 to vector<8x8xf32>
    %521 = arith.select %408, %519, %520 : vector<8x8xi1>, vector<8x8xf32>
    %cst_135 = arith.constant dense<0.000000e+00> : vector<8xf32>
    %522 = vector.multi_reduction <add>, %521, %cst_135 [0] : vector<8x8xf32> to vector<8xf32>
    %523 = vector.shape_cast %522 : vector<8xf32> to vector<1x8xf32>
    %524 = vector.broadcast %c6_i32_131 : i32 to vector<8x8xi32>
    %525 = arith.cmpi eq, %406, %524 : vector<8x8xi32>
    %526 = vector.shape_cast %523 : vector<1x8xf32> to vector<1x8xf32>
    %527 = vector.broadcast %526 : vector<1x8xf32> to vector<8x8xf32>
    %528 = arith.select %525, %527, %511 : vector<8x8xi1>, vector<8x8xf32>
    %c7_i32_136 = arith.constant 7 : i32
    %529 = vector.broadcast %c7_i32_136 : i32 to vector<8x8xi32>
    %530 = arith.cmpi eq, %407, %529 : vector<8x8xi32>
    %cst_137 = arith.constant 0.000000e+00 : f32
    %531 = vector.broadcast %cst_137 : f32 to vector<8x8xf32>
    %532 = arith.select %530, %405, %531 : vector<8x8xi1>, vector<8x8xf32>
    %cst_138 = arith.constant dense<0.000000e+00> : vector<8xf32>
    %533 = vector.multi_reduction <add>, %532, %cst_138 [1] : vector<8x8xf32> to vector<8xf32>
    %534 = vector.shape_cast %533 : vector<8xf32> to vector<8x1xf32>
    %cst_139 = arith.constant 0.000000e+00 : f32
    %535 = vector.shape_cast %534 : vector<8x1xf32> to vector<8x1xf32>
    %536 = vector.broadcast %535 : vector<8x1xf32> to vector<8x8xf32>
    %537 = vector.broadcast %cst_139 : f32 to vector<8x8xf32>
    %538 = arith.select %408, %536, %537 : vector<8x8xi1>, vector<8x8xf32>
    %cst_140 = arith.constant dense<0.000000e+00> : vector<8xf32>
    %539 = vector.multi_reduction <add>, %538, %cst_140 [0] : vector<8x8xf32> to vector<8xf32>
    %540 = vector.shape_cast %539 : vector<8xf32> to vector<1x8xf32>
    %541 = vector.broadcast %c7_i32_136 : i32 to vector<8x8xi32>
    %542 = arith.cmpi eq, %406, %541 : vector<8x8xi32>
    %543 = vector.shape_cast %540 : vector<1x8xf32> to vector<1x8xf32>
    %544 = vector.broadcast %543 : vector<1x8xf32> to vector<8x8xf32>
    %545 = arith.select %542, %544, %528 : vector<8x8xi1>, vector<8x8xf32>
    %c8_i32_141 = arith.constant 8 : i32
    %546 = arith.cmpi sle, %0, %1 : vector<8x8xi32>
    %547 = arith.select %546, %405, %545 : vector<8x8xi1>, vector<8x8xf32>
    %548 = tpu.iota {dimensions = array<i32: 0>} : vector<8x8xi32>
    %549 = tpu.iota {dimensions = array<i32: 1>} : vector<8x8xi32>
    %550 = tpu.iota {dimensions = array<i32: 1>} : vector<1x8xi32>
    %551 = arith.cmpi eq, %548, %549 : vector<8x8xi32>
    %cst_142 = arith.constant 1.000000e+00 : f32
    %cst_143 = arith.constant 0.000000e+00 : f32
    %552 = vector.broadcast %cst_142 : f32 to vector<8x8xf32>
    %553 = vector.broadcast %cst_143 : f32 to vector<8x8xf32>
    %554 = arith.select %551, %552, %553 : vector<8x8xi1>, vector<8x8xf32>
    %cst_144 = arith.constant 0.000000e+00 : f32
    %555 = vector.broadcast %cst_144 : f32 to vector<1x1xf32>
    %c0_i32_145 = arith.constant 0 : i32
    %556 = vector.broadcast %c0_i32_145 : i32 to vector<8x8xi32>
    %557 = arith.cmpi eq, %548, %556 : vector<8x8xi32>
    %558 = vector.broadcast %c0_i32_145 : i32 to vector<8x8xi32>
    %559 = arith.cmpi eq, %549, %558 : vector<8x8xi32>
    %cst_146 = arith.constant 0.000000e+00 : f32
    %560 = vector.broadcast %cst_146 : f32 to vector<8x8xf32>
    %561 = arith.select %557, %547, %560 : vector<8x8xi1>, vector<8x8xf32>
    %cst_147 = arith.constant dense<0.000000e+00> : vector<8xf32>
    %562 = vector.multi_reduction <add>, %561, %cst_147 [0] : vector<8x8xf32> to vector<8xf32>
    %563 = vector.shape_cast %562 : vector<8xf32> to vector<1x8xf32>
    %cst_148 = arith.constant 0.000000e+00 : f32
    %564 = vector.broadcast %cst_148 : f32 to vector<8x8xf32>
    %565 = arith.select %557, %554, %564 : vector<8x8xi1>, vector<8x8xf32>
    %cst_149 = arith.constant dense<0.000000e+00> : vector<8xf32>
    %566 = vector.multi_reduction <add>, %565, %cst_149 [0] : vector<8x8xf32> to vector<8xf32>
    %567 = vector.shape_cast %566 : vector<8xf32> to vector<1x8xf32>
    %568 = vector.broadcast %c0_i32_145 : i32 to vector<1x8xi32>
    %569 = arith.cmpi eq, %550, %568 : vector<1x8xi32>
    %cst_150 = arith.constant 0.000000e+00 : f32
    %570 = vector.broadcast %cst_150 : f32 to vector<1x8xf32>
    %571 = arith.select %569, %563, %570 : vector<1x8xi1>, vector<1x8xf32>
    %cst_151 = arith.constant dense<0.000000e+00> : vector<1xf32>
    %572 = vector.multi_reduction <add>, %571, %cst_151 [1] : vector<1x8xf32> to vector<1xf32>
    %573 = vector.shape_cast %572 : vector<1xf32> to vector<1x1xf32>
    %cst_152 = arith.constant 1.000000e+00 : f32
    %574 = vector.broadcast %cst_152 : f32 to vector<1x1xf32>
    %575 = arith.divf %574, %573 : vector<1x1xf32>
    %576 = vector.broadcast %575 : vector<1x1xf32> to vector<1x8xf32>
    %577 = arith.mulf %563, %576 : vector<1x8xf32>
    %578 = vector.broadcast %575 : vector<1x1xf32> to vector<1x8xf32>
    %579 = arith.mulf %567, %578 : vector<1x8xf32>
    %cst_153 = arith.constant 0.000000e+00 : f32
    %580 = vector.broadcast %cst_153 : f32 to vector<8x8xf32>
    %581 = arith.select %559, %547, %580 : vector<8x8xi1>, vector<8x8xf32>
    %cst_154 = arith.constant dense<0.000000e+00> : vector<8xf32>
    %582 = vector.multi_reduction <add>, %581, %cst_154 [1] : vector<8x8xf32> to vector<8xf32>
    %583 = vector.shape_cast %582 : vector<8xf32> to vector<8x1xf32>
    %584 = vector.broadcast %583 : vector<8x1xf32> to vector<8x8xf32>
    %585 = vector.broadcast %577 : vector<1x8xf32> to vector<8x8xf32>
    %586 = arith.mulf %584, %585 : vector<8x8xf32>
    %587 = arith.subf %547, %586 : vector<8x8xf32>
    %588 = vector.shape_cast %577 : vector<1x8xf32> to vector<1x8xf32>
    %589 = vector.broadcast %588 : vector<1x8xf32> to vector<8x8xf32>
    %590 = arith.select %557, %589, %587 : vector<8x8xi1>, vector<8x8xf32>
    %591 = vector.broadcast %583 : vector<8x1xf32> to vector<8x8xf32>
    %592 = vector.broadcast %579 : vector<1x8xf32> to vector<8x8xf32>
    %593 = arith.mulf %591, %592 : vector<8x8xf32>
    %594 = arith.subf %554, %593 : vector<8x8xf32>
    %595 = vector.shape_cast %579 : vector<1x8xf32> to vector<1x8xf32>
    %596 = vector.broadcast %595 : vector<1x8xf32> to vector<8x8xf32>
    %597 = arith.select %557, %596, %594 : vector<8x8xi1>, vector<8x8xf32>
    %598 = math.log %573 : vector<1x1xf32>
    %599 = arith.addf %555, %598 : vector<1x1xf32>
    %600 = arith.addf %555, %573 : vector<1x1xf32>
    %c1_i32_155 = arith.constant 1 : i32
    %601 = vector.broadcast %c1_i32_155 : i32 to vector<8x8xi32>
    %602 = arith.cmpi eq, %548, %601 : vector<8x8xi32>
    %603 = vector.broadcast %c1_i32_155 : i32 to vector<8x8xi32>
    %604 = arith.cmpi eq, %549, %603 : vector<8x8xi32>
    %cst_156 = arith.constant 0.000000e+00 : f32
    %605 = vector.broadcast %cst_156 : f32 to vector<8x8xf32>
    %606 = arith.select %602, %590, %605 : vector<8x8xi1>, vector<8x8xf32>
    %cst_157 = arith.constant dense<0.000000e+00> : vector<8xf32>
    %607 = vector.multi_reduction <add>, %606, %cst_157 [0] : vector<8x8xf32> to vector<8xf32>
    %608 = vector.shape_cast %607 : vector<8xf32> to vector<1x8xf32>
    %cst_158 = arith.constant 0.000000e+00 : f32
    %609 = vector.broadcast %cst_158 : f32 to vector<8x8xf32>
    %610 = arith.select %602, %597, %609 : vector<8x8xi1>, vector<8x8xf32>
    %cst_159 = arith.constant dense<0.000000e+00> : vector<8xf32>
    %611 = vector.multi_reduction <add>, %610, %cst_159 [0] : vector<8x8xf32> to vector<8xf32>
    %612 = vector.shape_cast %611 : vector<8xf32> to vector<1x8xf32>
    %613 = vector.broadcast %c1_i32_155 : i32 to vector<1x8xi32>
    %614 = arith.cmpi eq, %550, %613 : vector<1x8xi32>
    %cst_160 = arith.constant 0.000000e+00 : f32
    %615 = vector.broadcast %cst_160 : f32 to vector<1x8xf32>
    %616 = arith.select %614, %608, %615 : vector<1x8xi1>, vector<1x8xf32>
    %cst_161 = arith.constant dense<0.000000e+00> : vector<1xf32>
    %617 = vector.multi_reduction <add>, %616, %cst_161 [1] : vector<1x8xf32> to vector<1xf32>
    %618 = vector.shape_cast %617 : vector<1xf32> to vector<1x1xf32>
    %cst_162 = arith.constant 1.000000e+00 : f32
    %619 = vector.broadcast %cst_162 : f32 to vector<1x1xf32>
    %620 = arith.divf %619, %618 : vector<1x1xf32>
    %621 = vector.broadcast %620 : vector<1x1xf32> to vector<1x8xf32>
    %622 = arith.mulf %608, %621 : vector<1x8xf32>
    %623 = vector.broadcast %620 : vector<1x1xf32> to vector<1x8xf32>
    %624 = arith.mulf %612, %623 : vector<1x8xf32>
    %cst_163 = arith.constant 0.000000e+00 : f32
    %625 = vector.broadcast %cst_163 : f32 to vector<8x8xf32>
    %626 = arith.select %604, %590, %625 : vector<8x8xi1>, vector<8x8xf32>
    %cst_164 = arith.constant dense<0.000000e+00> : vector<8xf32>
    %627 = vector.multi_reduction <add>, %626, %cst_164 [1] : vector<8x8xf32> to vector<8xf32>
    %628 = vector.shape_cast %627 : vector<8xf32> to vector<8x1xf32>
    %629 = vector.broadcast %628 : vector<8x1xf32> to vector<8x8xf32>
    %630 = vector.broadcast %622 : vector<1x8xf32> to vector<8x8xf32>
    %631 = arith.mulf %629, %630 : vector<8x8xf32>
    %632 = arith.subf %590, %631 : vector<8x8xf32>
    %633 = vector.shape_cast %622 : vector<1x8xf32> to vector<1x8xf32>
    %634 = vector.broadcast %633 : vector<1x8xf32> to vector<8x8xf32>
    %635 = arith.select %602, %634, %632 : vector<8x8xi1>, vector<8x8xf32>
    %636 = vector.broadcast %628 : vector<8x1xf32> to vector<8x8xf32>
    %637 = vector.broadcast %624 : vector<1x8xf32> to vector<8x8xf32>
    %638 = arith.mulf %636, %637 : vector<8x8xf32>
    %639 = arith.subf %597, %638 : vector<8x8xf32>
    %640 = vector.shape_cast %624 : vector<1x8xf32> to vector<1x8xf32>
    %641 = vector.broadcast %640 : vector<1x8xf32> to vector<8x8xf32>
    %642 = arith.select %602, %641, %639 : vector<8x8xi1>, vector<8x8xf32>
    %643 = math.log %618 : vector<1x1xf32>
    %644 = arith.addf %599, %643 : vector<1x1xf32>
    %645 = arith.addf %600, %618 : vector<1x1xf32>
    %c2_i32_165 = arith.constant 2 : i32
    %646 = vector.broadcast %c2_i32_165 : i32 to vector<8x8xi32>
    %647 = arith.cmpi eq, %548, %646 : vector<8x8xi32>
    %648 = vector.broadcast %c2_i32_165 : i32 to vector<8x8xi32>
    %649 = arith.cmpi eq, %549, %648 : vector<8x8xi32>
    %cst_166 = arith.constant 0.000000e+00 : f32
    %650 = vector.broadcast %cst_166 : f32 to vector<8x8xf32>
    %651 = arith.select %647, %635, %650 : vector<8x8xi1>, vector<8x8xf32>
    %cst_167 = arith.constant dense<0.000000e+00> : vector<8xf32>
    %652 = vector.multi_reduction <add>, %651, %cst_167 [0] : vector<8x8xf32> to vector<8xf32>
    %653 = vector.shape_cast %652 : vector<8xf32> to vector<1x8xf32>
    %cst_168 = arith.constant 0.000000e+00 : f32
    %654 = vector.broadcast %cst_168 : f32 to vector<8x8xf32>
    %655 = arith.select %647, %642, %654 : vector<8x8xi1>, vector<8x8xf32>
    %cst_169 = arith.constant dense<0.000000e+00> : vector<8xf32>
    %656 = vector.multi_reduction <add>, %655, %cst_169 [0] : vector<8x8xf32> to vector<8xf32>
    %657 = vector.shape_cast %656 : vector<8xf32> to vector<1x8xf32>
    %658 = vector.broadcast %c2_i32_165 : i32 to vector<1x8xi32>
    %659 = arith.cmpi eq, %550, %658 : vector<1x8xi32>
    %cst_170 = arith.constant 0.000000e+00 : f32
    %660 = vector.broadcast %cst_170 : f32 to vector<1x8xf32>
    %661 = arith.select %659, %653, %660 : vector<1x8xi1>, vector<1x8xf32>
    %cst_171 = arith.constant dense<0.000000e+00> : vector<1xf32>
    %662 = vector.multi_reduction <add>, %661, %cst_171 [1] : vector<1x8xf32> to vector<1xf32>
    %663 = vector.shape_cast %662 : vector<1xf32> to vector<1x1xf32>
    %cst_172 = arith.constant 1.000000e+00 : f32
    %664 = vector.broadcast %cst_172 : f32 to vector<1x1xf32>
    %665 = arith.divf %664, %663 : vector<1x1xf32>
    %666 = vector.broadcast %665 : vector<1x1xf32> to vector<1x8xf32>
    %667 = arith.mulf %653, %666 : vector<1x8xf32>
    %668 = vector.broadcast %665 : vector<1x1xf32> to vector<1x8xf32>
    %669 = arith.mulf %657, %668 : vector<1x8xf32>
    %cst_173 = arith.constant 0.000000e+00 : f32
    %670 = vector.broadcast %cst_173 : f32 to vector<8x8xf32>
    %671 = arith.select %649, %635, %670 : vector<8x8xi1>, vector<8x8xf32>
    %cst_174 = arith.constant dense<0.000000e+00> : vector<8xf32>
    %672 = vector.multi_reduction <add>, %671, %cst_174 [1] : vector<8x8xf32> to vector<8xf32>
    %673 = vector.shape_cast %672 : vector<8xf32> to vector<8x1xf32>
    %674 = vector.broadcast %673 : vector<8x1xf32> to vector<8x8xf32>
    %675 = vector.broadcast %667 : vector<1x8xf32> to vector<8x8xf32>
    %676 = arith.mulf %674, %675 : vector<8x8xf32>
    %677 = arith.subf %635, %676 : vector<8x8xf32>
    %678 = vector.shape_cast %667 : vector<1x8xf32> to vector<1x8xf32>
    %679 = vector.broadcast %678 : vector<1x8xf32> to vector<8x8xf32>
    %680 = arith.select %647, %679, %677 : vector<8x8xi1>, vector<8x8xf32>
    %681 = vector.broadcast %673 : vector<8x1xf32> to vector<8x8xf32>
    %682 = vector.broadcast %669 : vector<1x8xf32> to vector<8x8xf32>
    %683 = arith.mulf %681, %682 : vector<8x8xf32>
    %684 = arith.subf %642, %683 : vector<8x8xf32>
    %685 = vector.shape_cast %669 : vector<1x8xf32> to vector<1x8xf32>
    %686 = vector.broadcast %685 : vector<1x8xf32> to vector<8x8xf32>
    %687 = arith.select %647, %686, %684 : vector<8x8xi1>, vector<8x8xf32>
    %688 = math.log %663 : vector<1x1xf32>
    %689 = arith.addf %644, %688 : vector<1x1xf32>
    %690 = arith.addf %645, %663 : vector<1x1xf32>
    %c3_i32_175 = arith.constant 3 : i32
    %691 = vector.broadcast %c3_i32_175 : i32 to vector<8x8xi32>
    %692 = arith.cmpi eq, %548, %691 : vector<8x8xi32>
    %693 = vector.broadcast %c3_i32_175 : i32 to vector<8x8xi32>
    %694 = arith.cmpi eq, %549, %693 : vector<8x8xi32>
    %cst_176 = arith.constant 0.000000e+00 : f32
    %695 = vector.broadcast %cst_176 : f32 to vector<8x8xf32>
    %696 = arith.select %692, %680, %695 : vector<8x8xi1>, vector<8x8xf32>
    %cst_177 = arith.constant dense<0.000000e+00> : vector<8xf32>
    %697 = vector.multi_reduction <add>, %696, %cst_177 [0] : vector<8x8xf32> to vector<8xf32>
    %698 = vector.shape_cast %697 : vector<8xf32> to vector<1x8xf32>
    %cst_178 = arith.constant 0.000000e+00 : f32
    %699 = vector.broadcast %cst_178 : f32 to vector<8x8xf32>
    %700 = arith.select %692, %687, %699 : vector<8x8xi1>, vector<8x8xf32>
    %cst_179 = arith.constant dense<0.000000e+00> : vector<8xf32>
    %701 = vector.multi_reduction <add>, %700, %cst_179 [0] : vector<8x8xf32> to vector<8xf32>
    %702 = vector.shape_cast %701 : vector<8xf32> to vector<1x8xf32>
    %703 = vector.broadcast %c3_i32_175 : i32 to vector<1x8xi32>
    %704 = arith.cmpi eq, %550, %703 : vector<1x8xi32>
    %cst_180 = arith.constant 0.000000e+00 : f32
    %705 = vector.broadcast %cst_180 : f32 to vector<1x8xf32>
    %706 = arith.select %704, %698, %705 : vector<1x8xi1>, vector<1x8xf32>
    %cst_181 = arith.constant dense<0.000000e+00> : vector<1xf32>
    %707 = vector.multi_reduction <add>, %706, %cst_181 [1] : vector<1x8xf32> to vector<1xf32>
    %708 = vector.shape_cast %707 : vector<1xf32> to vector<1x1xf32>
    %cst_182 = arith.constant 1.000000e+00 : f32
    %709 = vector.broadcast %cst_182 : f32 to vector<1x1xf32>
    %710 = arith.divf %709, %708 : vector<1x1xf32>
    %711 = vector.broadcast %710 : vector<1x1xf32> to vector<1x8xf32>
    %712 = arith.mulf %698, %711 : vector<1x8xf32>
    %713 = vector.broadcast %710 : vector<1x1xf32> to vector<1x8xf32>
    %714 = arith.mulf %702, %713 : vector<1x8xf32>
    %cst_183 = arith.constant 0.000000e+00 : f32
    %715 = vector.broadcast %cst_183 : f32 to vector<8x8xf32>
    %716 = arith.select %694, %680, %715 : vector<8x8xi1>, vector<8x8xf32>
    %cst_184 = arith.constant dense<0.000000e+00> : vector<8xf32>
    %717 = vector.multi_reduction <add>, %716, %cst_184 [1] : vector<8x8xf32> to vector<8xf32>
    %718 = vector.shape_cast %717 : vector<8xf32> to vector<8x1xf32>
    %719 = vector.broadcast %718 : vector<8x1xf32> to vector<8x8xf32>
    %720 = vector.broadcast %712 : vector<1x8xf32> to vector<8x8xf32>
    %721 = arith.mulf %719, %720 : vector<8x8xf32>
    %722 = arith.subf %680, %721 : vector<8x8xf32>
    %723 = vector.shape_cast %712 : vector<1x8xf32> to vector<1x8xf32>
    %724 = vector.broadcast %723 : vector<1x8xf32> to vector<8x8xf32>
    %725 = arith.select %692, %724, %722 : vector<8x8xi1>, vector<8x8xf32>
    %726 = vector.broadcast %718 : vector<8x1xf32> to vector<8x8xf32>
    %727 = vector.broadcast %714 : vector<1x8xf32> to vector<8x8xf32>
    %728 = arith.mulf %726, %727 : vector<8x8xf32>
    %729 = arith.subf %687, %728 : vector<8x8xf32>
    %730 = vector.shape_cast %714 : vector<1x8xf32> to vector<1x8xf32>
    %731 = vector.broadcast %730 : vector<1x8xf32> to vector<8x8xf32>
    %732 = arith.select %692, %731, %729 : vector<8x8xi1>, vector<8x8xf32>
    %733 = math.log %708 : vector<1x1xf32>
    %734 = arith.addf %689, %733 : vector<1x1xf32>
    %735 = arith.addf %690, %708 : vector<1x1xf32>
    %c4_i32_185 = arith.constant 4 : i32
    %736 = vector.broadcast %c4_i32_185 : i32 to vector<8x8xi32>
    %737 = arith.cmpi eq, %548, %736 : vector<8x8xi32>
    %738 = vector.broadcast %c4_i32_185 : i32 to vector<8x8xi32>
    %739 = arith.cmpi eq, %549, %738 : vector<8x8xi32>
    %cst_186 = arith.constant 0.000000e+00 : f32
    %740 = vector.broadcast %cst_186 : f32 to vector<8x8xf32>
    %741 = arith.select %737, %725, %740 : vector<8x8xi1>, vector<8x8xf32>
    %cst_187 = arith.constant dense<0.000000e+00> : vector<8xf32>
    %742 = vector.multi_reduction <add>, %741, %cst_187 [0] : vector<8x8xf32> to vector<8xf32>
    %743 = vector.shape_cast %742 : vector<8xf32> to vector<1x8xf32>
    %cst_188 = arith.constant 0.000000e+00 : f32
    %744 = vector.broadcast %cst_188 : f32 to vector<8x8xf32>
    %745 = arith.select %737, %732, %744 : vector<8x8xi1>, vector<8x8xf32>
    %cst_189 = arith.constant dense<0.000000e+00> : vector<8xf32>
    %746 = vector.multi_reduction <add>, %745, %cst_189 [0] : vector<8x8xf32> to vector<8xf32>
    %747 = vector.shape_cast %746 : vector<8xf32> to vector<1x8xf32>
    %748 = vector.broadcast %c4_i32_185 : i32 to vector<1x8xi32>
    %749 = arith.cmpi eq, %550, %748 : vector<1x8xi32>
    %cst_190 = arith.constant 0.000000e+00 : f32
    %750 = vector.broadcast %cst_190 : f32 to vector<1x8xf32>
    %751 = arith.select %749, %743, %750 : vector<1x8xi1>, vector<1x8xf32>
    %cst_191 = arith.constant dense<0.000000e+00> : vector<1xf32>
    %752 = vector.multi_reduction <add>, %751, %cst_191 [1] : vector<1x8xf32> to vector<1xf32>
    %753 = vector.shape_cast %752 : vector<1xf32> to vector<1x1xf32>
    %cst_192 = arith.constant 1.000000e+00 : f32
    %754 = vector.broadcast %cst_192 : f32 to vector<1x1xf32>
    %755 = arith.divf %754, %753 : vector<1x1xf32>
    %756 = vector.broadcast %755 : vector<1x1xf32> to vector<1x8xf32>
    %757 = arith.mulf %743, %756 : vector<1x8xf32>
    %758 = vector.broadcast %755 : vector<1x1xf32> to vector<1x8xf32>
    %759 = arith.mulf %747, %758 : vector<1x8xf32>
    %cst_193 = arith.constant 0.000000e+00 : f32
    %760 = vector.broadcast %cst_193 : f32 to vector<8x8xf32>
    %761 = arith.select %739, %725, %760 : vector<8x8xi1>, vector<8x8xf32>
    %cst_194 = arith.constant dense<0.000000e+00> : vector<8xf32>
    %762 = vector.multi_reduction <add>, %761, %cst_194 [1] : vector<8x8xf32> to vector<8xf32>
    %763 = vector.shape_cast %762 : vector<8xf32> to vector<8x1xf32>
    %764 = vector.broadcast %763 : vector<8x1xf32> to vector<8x8xf32>
    %765 = vector.broadcast %757 : vector<1x8xf32> to vector<8x8xf32>
    %766 = arith.mulf %764, %765 : vector<8x8xf32>
    %767 = arith.subf %725, %766 : vector<8x8xf32>
    %768 = vector.shape_cast %757 : vector<1x8xf32> to vector<1x8xf32>
    %769 = vector.broadcast %768 : vector<1x8xf32> to vector<8x8xf32>
    %770 = arith.select %737, %769, %767 : vector<8x8xi1>, vector<8x8xf32>
    %771 = vector.broadcast %763 : vector<8x1xf32> to vector<8x8xf32>
    %772 = vector.broadcast %759 : vector<1x8xf32> to vector<8x8xf32>
    %773 = arith.mulf %771, %772 : vector<8x8xf32>
    %774 = arith.subf %732, %773 : vector<8x8xf32>
    %775 = vector.shape_cast %759 : vector<1x8xf32> to vector<1x8xf32>
    %776 = vector.broadcast %775 : vector<1x8xf32> to vector<8x8xf32>
    %777 = arith.select %737, %776, %774 : vector<8x8xi1>, vector<8x8xf32>
    %778 = math.log %753 : vector<1x1xf32>
    %779 = arith.addf %734, %778 : vector<1x1xf32>
    %780 = arith.addf %735, %753 : vector<1x1xf32>
    %c5_i32_195 = arith.constant 5 : i32
    %781 = vector.broadcast %c5_i32_195 : i32 to vector<8x8xi32>
    %782 = arith.cmpi eq, %548, %781 : vector<8x8xi32>
    %783 = vector.broadcast %c5_i32_195 : i32 to vector<8x8xi32>
    %784 = arith.cmpi eq, %549, %783 : vector<8x8xi32>
    %cst_196 = arith.constant 0.000000e+00 : f32
    %785 = vector.broadcast %cst_196 : f32 to vector<8x8xf32>
    %786 = arith.select %782, %770, %785 : vector<8x8xi1>, vector<8x8xf32>
    %cst_197 = arith.constant dense<0.000000e+00> : vector<8xf32>
    %787 = vector.multi_reduction <add>, %786, %cst_197 [0] : vector<8x8xf32> to vector<8xf32>
    %788 = vector.shape_cast %787 : vector<8xf32> to vector<1x8xf32>
    %cst_198 = arith.constant 0.000000e+00 : f32
    %789 = vector.broadcast %cst_198 : f32 to vector<8x8xf32>
    %790 = arith.select %782, %777, %789 : vector<8x8xi1>, vector<8x8xf32>
    %cst_199 = arith.constant dense<0.000000e+00> : vector<8xf32>
    %791 = vector.multi_reduction <add>, %790, %cst_199 [0] : vector<8x8xf32> to vector<8xf32>
    %792 = vector.shape_cast %791 : vector<8xf32> to vector<1x8xf32>
    %793 = vector.broadcast %c5_i32_195 : i32 to vector<1x8xi32>
    %794 = arith.cmpi eq, %550, %793 : vector<1x8xi32>
    %cst_200 = arith.constant 0.000000e+00 : f32
    %795 = vector.broadcast %cst_200 : f32 to vector<1x8xf32>
    %796 = arith.select %794, %788, %795 : vector<1x8xi1>, vector<1x8xf32>
    %cst_201 = arith.constant dense<0.000000e+00> : vector<1xf32>
    %797 = vector.multi_reduction <add>, %796, %cst_201 [1] : vector<1x8xf32> to vector<1xf32>
    %798 = vector.shape_cast %797 : vector<1xf32> to vector<1x1xf32>
    %cst_202 = arith.constant 1.000000e+00 : f32
    %799 = vector.broadcast %cst_202 : f32 to vector<1x1xf32>
    %800 = arith.divf %799, %798 : vector<1x1xf32>
    %801 = vector.broadcast %800 : vector<1x1xf32> to vector<1x8xf32>
    %802 = arith.mulf %788, %801 : vector<1x8xf32>
    %803 = vector.broadcast %800 : vector<1x1xf32> to vector<1x8xf32>
    %804 = arith.mulf %792, %803 : vector<1x8xf32>
    %cst_203 = arith.constant 0.000000e+00 : f32
    %805 = vector.broadcast %cst_203 : f32 to vector<8x8xf32>
    %806 = arith.select %784, %770, %805 : vector<8x8xi1>, vector<8x8xf32>
    %cst_204 = arith.constant dense<0.000000e+00> : vector<8xf32>
    %807 = vector.multi_reduction <add>, %806, %cst_204 [1] : vector<8x8xf32> to vector<8xf32>
    %808 = vector.shape_cast %807 : vector<8xf32> to vector<8x1xf32>
    %809 = vector.broadcast %808 : vector<8x1xf32> to vector<8x8xf32>
    %810 = vector.broadcast %802 : vector<1x8xf32> to vector<8x8xf32>
    %811 = arith.mulf %809, %810 : vector<8x8xf32>
    %812 = arith.subf %770, %811 : vector<8x8xf32>
    %813 = vector.shape_cast %802 : vector<1x8xf32> to vector<1x8xf32>
    %814 = vector.broadcast %813 : vector<1x8xf32> to vector<8x8xf32>
    %815 = arith.select %782, %814, %812 : vector<8x8xi1>, vector<8x8xf32>
    %816 = vector.broadcast %808 : vector<8x1xf32> to vector<8x8xf32>
    %817 = vector.broadcast %804 : vector<1x8xf32> to vector<8x8xf32>
    %818 = arith.mulf %816, %817 : vector<8x8xf32>
    %819 = arith.subf %777, %818 : vector<8x8xf32>
    %820 = vector.shape_cast %804 : vector<1x8xf32> to vector<1x8xf32>
    %821 = vector.broadcast %820 : vector<1x8xf32> to vector<8x8xf32>
    %822 = arith.select %782, %821, %819 : vector<8x8xi1>, vector<8x8xf32>
    %823 = math.log %798 : vector<1x1xf32>
    %824 = arith.addf %779, %823 : vector<1x1xf32>
    %825 = arith.addf %780, %798 : vector<1x1xf32>
    %c6_i32_205 = arith.constant 6 : i32
    %826 = vector.broadcast %c6_i32_205 : i32 to vector<8x8xi32>
    %827 = arith.cmpi eq, %548, %826 : vector<8x8xi32>
    %828 = vector.broadcast %c6_i32_205 : i32 to vector<8x8xi32>
    %829 = arith.cmpi eq, %549, %828 : vector<8x8xi32>
    %cst_206 = arith.constant 0.000000e+00 : f32
    %830 = vector.broadcast %cst_206 : f32 to vector<8x8xf32>
    %831 = arith.select %827, %815, %830 : vector<8x8xi1>, vector<8x8xf32>
    %cst_207 = arith.constant dense<0.000000e+00> : vector<8xf32>
    %832 = vector.multi_reduction <add>, %831, %cst_207 [0] : vector<8x8xf32> to vector<8xf32>
    %833 = vector.shape_cast %832 : vector<8xf32> to vector<1x8xf32>
    %cst_208 = arith.constant 0.000000e+00 : f32
    %834 = vector.broadcast %cst_208 : f32 to vector<8x8xf32>
    %835 = arith.select %827, %822, %834 : vector<8x8xi1>, vector<8x8xf32>
    %cst_209 = arith.constant dense<0.000000e+00> : vector<8xf32>
    %836 = vector.multi_reduction <add>, %835, %cst_209 [0] : vector<8x8xf32> to vector<8xf32>
    %837 = vector.shape_cast %836 : vector<8xf32> to vector<1x8xf32>
    %838 = vector.broadcast %c6_i32_205 : i32 to vector<1x8xi32>
    %839 = arith.cmpi eq, %550, %838 : vector<1x8xi32>
    %cst_210 = arith.constant 0.000000e+00 : f32
    %840 = vector.broadcast %cst_210 : f32 to vector<1x8xf32>
    %841 = arith.select %839, %833, %840 : vector<1x8xi1>, vector<1x8xf32>
    %cst_211 = arith.constant dense<0.000000e+00> : vector<1xf32>
    %842 = vector.multi_reduction <add>, %841, %cst_211 [1] : vector<1x8xf32> to vector<1xf32>
    %843 = vector.shape_cast %842 : vector<1xf32> to vector<1x1xf32>
    %cst_212 = arith.constant 1.000000e+00 : f32
    %844 = vector.broadcast %cst_212 : f32 to vector<1x1xf32>
    %845 = arith.divf %844, %843 : vector<1x1xf32>
    %846 = vector.broadcast %845 : vector<1x1xf32> to vector<1x8xf32>
    %847 = arith.mulf %833, %846 : vector<1x8xf32>
    %848 = vector.broadcast %845 : vector<1x1xf32> to vector<1x8xf32>
    %849 = arith.mulf %837, %848 : vector<1x8xf32>
    %cst_213 = arith.constant 0.000000e+00 : f32
    %850 = vector.broadcast %cst_213 : f32 to vector<8x8xf32>
    %851 = arith.select %829, %815, %850 : vector<8x8xi1>, vector<8x8xf32>
    %cst_214 = arith.constant dense<0.000000e+00> : vector<8xf32>
    %852 = vector.multi_reduction <add>, %851, %cst_214 [1] : vector<8x8xf32> to vector<8xf32>
    %853 = vector.shape_cast %852 : vector<8xf32> to vector<8x1xf32>
    %854 = vector.broadcast %853 : vector<8x1xf32> to vector<8x8xf32>
    %855 = vector.broadcast %847 : vector<1x8xf32> to vector<8x8xf32>
    %856 = arith.mulf %854, %855 : vector<8x8xf32>
    %857 = arith.subf %815, %856 : vector<8x8xf32>
    %858 = vector.shape_cast %847 : vector<1x8xf32> to vector<1x8xf32>
    %859 = vector.broadcast %858 : vector<1x8xf32> to vector<8x8xf32>
    %860 = arith.select %827, %859, %857 : vector<8x8xi1>, vector<8x8xf32>
    %861 = vector.broadcast %853 : vector<8x1xf32> to vector<8x8xf32>
    %862 = vector.broadcast %849 : vector<1x8xf32> to vector<8x8xf32>
    %863 = arith.mulf %861, %862 : vector<8x8xf32>
    %864 = arith.subf %822, %863 : vector<8x8xf32>
    %865 = vector.shape_cast %849 : vector<1x8xf32> to vector<1x8xf32>
    %866 = vector.broadcast %865 : vector<1x8xf32> to vector<8x8xf32>
    %867 = arith.select %827, %866, %864 : vector<8x8xi1>, vector<8x8xf32>
    %868 = math.log %843 : vector<1x1xf32>
    %869 = arith.addf %824, %868 : vector<1x1xf32>
    %870 = arith.addf %825, %843 : vector<1x1xf32>
    %c7_i32_215 = arith.constant 7 : i32
    %871 = vector.broadcast %c7_i32_215 : i32 to vector<8x8xi32>
    %872 = arith.cmpi eq, %548, %871 : vector<8x8xi32>
    %873 = vector.broadcast %c7_i32_215 : i32 to vector<8x8xi32>
    %874 = arith.cmpi eq, %549, %873 : vector<8x8xi32>
    %cst_216 = arith.constant 0.000000e+00 : f32
    %875 = vector.broadcast %cst_216 : f32 to vector<8x8xf32>
    %876 = arith.select %872, %860, %875 : vector<8x8xi1>, vector<8x8xf32>
    %cst_217 = arith.constant dense<0.000000e+00> : vector<8xf32>
    %877 = vector.multi_reduction <add>, %876, %cst_217 [0] : vector<8x8xf32> to vector<8xf32>
    %878 = vector.shape_cast %877 : vector<8xf32> to vector<1x8xf32>
    %cst_218 = arith.constant 0.000000e+00 : f32
    %879 = vector.broadcast %cst_218 : f32 to vector<8x8xf32>
    %880 = arith.select %872, %867, %879 : vector<8x8xi1>, vector<8x8xf32>
    %cst_219 = arith.constant dense<0.000000e+00> : vector<8xf32>
    %881 = vector.multi_reduction <add>, %880, %cst_219 [0] : vector<8x8xf32> to vector<8xf32>
    %882 = vector.shape_cast %881 : vector<8xf32> to vector<1x8xf32>
    %883 = vector.broadcast %c7_i32_215 : i32 to vector<1x8xi32>
    %884 = arith.cmpi eq, %550, %883 : vector<1x8xi32>
    %cst_220 = arith.constant 0.000000e+00 : f32
    %885 = vector.broadcast %cst_220 : f32 to vector<1x8xf32>
    %886 = arith.select %884, %878, %885 : vector<1x8xi1>, vector<1x8xf32>
    %cst_221 = arith.constant dense<0.000000e+00> : vector<1xf32>
    %887 = vector.multi_reduction <add>, %886, %cst_221 [1] : vector<1x8xf32> to vector<1xf32>
    %888 = vector.shape_cast %887 : vector<1xf32> to vector<1x1xf32>
    %cst_222 = arith.constant 1.000000e+00 : f32
    %889 = vector.broadcast %cst_222 : f32 to vector<1x1xf32>
    %890 = arith.divf %889, %888 : vector<1x1xf32>
    %891 = vector.broadcast %890 : vector<1x1xf32> to vector<1x8xf32>
    %892 = arith.mulf %878, %891 : vector<1x8xf32>
    %893 = vector.broadcast %890 : vector<1x1xf32> to vector<1x8xf32>
    %894 = arith.mulf %882, %893 : vector<1x8xf32>
    %cst_223 = arith.constant 0.000000e+00 : f32
    %895 = vector.broadcast %cst_223 : f32 to vector<8x8xf32>
    %896 = arith.select %874, %860, %895 : vector<8x8xi1>, vector<8x8xf32>
    %cst_224 = arith.constant dense<0.000000e+00> : vector<8xf32>
    %897 = vector.multi_reduction <add>, %896, %cst_224 [1] : vector<8x8xf32> to vector<8xf32>
    %898 = vector.shape_cast %897 : vector<8xf32> to vector<8x1xf32>
    %899 = vector.broadcast %898 : vector<8x1xf32> to vector<8x8xf32>
    %900 = vector.broadcast %892 : vector<1x8xf32> to vector<8x8xf32>
    %901 = arith.mulf %899, %900 : vector<8x8xf32>
    %902 = arith.subf %860, %901 : vector<8x8xf32>
    %903 = vector.shape_cast %892 : vector<1x8xf32> to vector<1x8xf32>
    %904 = vector.broadcast %903 : vector<1x8xf32> to vector<8x8xf32>
    %905 = arith.select %872, %904, %902 : vector<8x8xi1>, vector<8x8xf32>
    %906 = vector.broadcast %898 : vector<8x1xf32> to vector<8x8xf32>
    %907 = vector.broadcast %894 : vector<1x8xf32> to vector<8x8xf32>
    %908 = arith.mulf %906, %907 : vector<8x8xf32>
    %909 = arith.subf %867, %908 : vector<8x8xf32>
    %910 = vector.shape_cast %894 : vector<1x8xf32> to vector<1x8xf32>
    %911 = vector.broadcast %910 : vector<1x8xf32> to vector<8x8xf32>
    %912 = arith.select %872, %911, %909 : vector<8x8xi1>, vector<8x8xf32>
    %913 = math.log %888 : vector<1x1xf32>
    %914 = arith.addf %869, %913 : vector<1x1xf32>
    %915 = arith.addf %870, %888 : vector<1x1xf32>
    %c8_i32_225 = arith.constant 8 : i32
    %916 = vector.broadcast %62 : vector<8x1xf32> to vector<8x8xf32>
    %917 = arith.mulf %545, %916 : vector<8x8xf32>
    %cst_226 = arith.constant dense<0.000000e+00> : vector<8xf32>
    %918 = vector.multi_reduction <add>, %917, %cst_226 [0] : vector<8x8xf32> to vector<8xf32>
    %919 = vector.shape_cast %918 : vector<8xf32> to vector<1x8xf32>
    %cst_227 = arith.constant 0.000000e+00 : f32
    %920 = vector.shape_cast %62 : vector<8x1xf32> to vector<8x1xf32>
    %921 = vector.broadcast %920 : vector<8x1xf32> to vector<8x8xf32>
    %922 = vector.broadcast %cst_227 : f32 to vector<8x8xf32>
    %923 = arith.select %2, %921, %922 : vector<8x8xi1>, vector<8x8xf32>
    %cst_228 = arith.constant dense<0.000000e+00> : vector<8xf32>
    %924 = vector.multi_reduction <add>, %923, %cst_228 [0] : vector<8x8xf32> to vector<8xf32>
    %925 = vector.shape_cast %924 : vector<8xf32> to vector<1x8xf32>
    %926 = arith.mulf %919, %925 : vector<1x8xf32>
    %cst_229 = arith.constant dense<0.000000e+00> : vector<1xf32>
    %927 = vector.multi_reduction <add>, %926, %cst_229 [1] : vector<1x8xf32> to vector<1xf32>
    %928 = vector.shape_cast %927 : vector<1xf32> to vector<1x1xf32>
    %cst_230 = arith.constant 14.7030163 : f32
    %929 = vector.broadcast %cst_230 : f32 to vector<1x1xf32>
    %930 = arith.subf %929, %914 : vector<1x1xf32>
    %931 = arith.addf %930, %928 : vector<1x1xf32>
    %cst_231 = arith.constant -5.000000e-01 : f32
    %932 = vector.broadcast %cst_231 : f32 to vector<1x1xf32>
    %933 = arith.mulf %932, %931 : vector<1x1xf32>
    %934 = arith.subf %60, %933 : vector<1x1xf32>
    %cst_232 = arith.constant dense<0.000000e+00> : vector<8xf32>
    %935 = vector.multi_reduction <add>, %912, %cst_232 [0] : vector<8x8xf32> to vector<8xf32>
    %936 = vector.shape_cast %935 : vector<8xf32> to vector<1x8xf32>
    %cst_233 = arith.constant dense<0.000000e+00> : vector<1xf32>
    %937 = vector.multi_reduction <add>, %936, %cst_233 [1] : vector<1x8xf32> to vector<1xf32>
    %938 = vector.shape_cast %937 : vector<1xf32> to vector<1x1xf32>
    %939 = arith.mulf %936, %5 : vector<1x8xf32>
    %cst_234 = arith.constant dense<0.000000e+00> : vector<1xf32>
    %940 = vector.multi_reduction <add>, %939, %cst_234 [1] : vector<1x8xf32> to vector<1xf32>
    %941 = vector.shape_cast %940 : vector<1xf32> to vector<1x1xf32>
    %cst_235 = arith.constant 0.000000e+00 : f32
    %942 = vector.shape_cast %5 : vector<1x8xf32> to vector<1x8xf32>
    %943 = vector.broadcast %942 : vector<1x8xf32> to vector<8x8xf32>
    %944 = vector.broadcast %cst_235 : f32 to vector<8x8xf32>
    %945 = arith.select %2, %943, %944 : vector<8x8xi1>, vector<8x8xf32>
    %cst_236 = arith.constant dense<0.000000e+00> : vector<8xf32>
    %946 = vector.multi_reduction <add>, %945, %cst_236 [1] : vector<8x8xf32> to vector<8xf32>
    %947 = vector.shape_cast %946 : vector<8xf32> to vector<8x1xf32>
    %948 = vector.broadcast %5 : vector<1x8xf32> to vector<8x8xf32>
    %949 = arith.mulf %912, %948 : vector<8x8xf32>
    %950 = vector.broadcast %947 : vector<8x1xf32> to vector<8x8xf32>
    %951 = arith.mulf %949, %950 : vector<8x8xf32>
    %cst_237 = arith.constant dense<0.000000e+00> : vector<8xf32>
    %952 = vector.multi_reduction <add>, %951, %cst_237 [1] : vector<8x8xf32> to vector<8xf32>
    %953 = vector.shape_cast %952 : vector<8xf32> to vector<8x1xf32>
    %cst_238 = arith.constant dense<0.000000e+00> : vector<1xf32>
    %954 = vector.multi_reduction <add>, %953, %cst_238 [0] : vector<8x1xf32> to vector<1xf32>
    %955 = vector.shape_cast %954 : vector<1xf32> to vector<1x1xf32>
    %956 = arith.mulf %919, %919 : vector<1x8xf32>
    %957 = vector.broadcast %938 : vector<1x1xf32> to vector<1x8xf32>
    %958 = arith.mulf %956, %957 : vector<1x8xf32>
    %cst_239 = arith.constant 2.000000e+00 : f32
    %959 = vector.broadcast %cst_239 : f32 to vector<1x8xf32>
    %960 = arith.mulf %959, %919 : vector<1x8xf32>
    %961 = vector.broadcast %941 : vector<1x1xf32> to vector<1x8xf32>
    %962 = arith.mulf %960, %961 : vector<1x8xf32>
    %963 = arith.subf %958, %962 : vector<1x8xf32>
    %964 = vector.broadcast %955 : vector<1x1xf32> to vector<1x8xf32>
    %965 = arith.addf %963, %964 : vector<1x8xf32>
    %966 = math.log %915 : vector<1x1xf32>
    %cst_240 = arith.constant 1.83787704 : f32
    %967 = vector.broadcast %cst_240 : f32 to vector<1x1xf32>
    %968 = arith.addf %967, %966 : vector<1x1xf32>
    %cst_241 = arith.constant 5.000000e-01 : f32
    %969 = vector.broadcast %cst_241 : f32 to vector<1x1xf32>
    %970 = arith.mulf %969, %968 : vector<1x1xf32>
    %cst_242 = arith.constant 5.000000e-01 : f32
    %971 = vector.broadcast %cst_242 : f32 to vector<1x8xf32>
    %972 = arith.mulf %971, %965 : vector<1x8xf32>
    %973 = vector.broadcast %934 : vector<1x1xf32> to vector<1x8xf32>
    %974 = arith.subf %973, %972 : vector<1x8xf32>
    %975 = vector.broadcast %970 : vector<1x1xf32> to vector<1x8xf32>
    %976 = arith.subf %974, %975 : vector<1x8xf32>
    %977 = math.exp %976 : vector<1x8xf32>
    %c0_243 = arith.constant 0 : index
    %c0_244 = arith.constant 0 : index
    %978 = vector.load %arg5[%c0_243, %c0_244] : memref<1x8xf32, #tpu.memory_space<vmem>>, vector<1x8xf32>
    tpu.vector_store %arg5[%c0_243, %c0_244], %977 {strides = array<i32>} : memref<1x8xf32, #tpu.memory_space<vmem>>, vector<1x8xf32>,
    return
  }
}

</mosaic_0001>

<llo_original>
// kernel: gaussian_multi_score_forward.1
$region0: #{gaussian_multi_score_forward.1}
  #allocation0 [shape = 'u32[]', space=smem, size = 0x4, offset = 0x4, fixed_abs, tag = 'smem constant byte address 0x4 - core index']
  #allocation1 [shape = 'u32[72,128]{1,0:T(1,128)}', space=vmem, size = 0x9000, scoped, tag = 'internal scratch']
  %s0 = inlined_call_operand.vmem [shape: f32[1,8], index: 0, kind: input, shape index: {}]
  %s1 = inlined_call_operand.vmem [shape: f32[1,8], index: 1, kind: input, shape index: {}]
  %s2 = inlined_call_operand.vmem [shape: f32[1,8], index: 2, kind: input, shape index: {}]
  %s3 = inlined_call_operand.hbm [shape: f32[8,8], index: 3, kind: input, shape index: {}]
  %s4 = inlined_call_operand.hbm [shape: f32[8,8], index: 4, kind: input, shape index: {}]
  %s5 = inlined_call_operand.hbm [shape: f32[1,8], index: 5, kind: output, shape index: {}]
  %s6 = sld [smem:[#allocation0]]
  $region38: #{gaussian_multi_score_forward.1} parent=0
    _
  %s8 = ssub.s32 1, %s6
  %s9 = scalar_select 0, %s8, %s6
  $region1: #{gaussian_multi_score_forward.1} parent=0
    #allocation2 [shape = 'u8[4096]{0}', space=vmem, size = 0x1000, scoped, tag = 'input window, operand 3, single buffered']
    #allocation3 [shape = 's32[1]{0}', space=sflag, size = 0x4, scoped, tag = 'scoped memory for gaussian_multi_score_forward.1']
    #allocation4 [shape = 's32[1]{0}', space=sflag, size = 0x4, scoped, tag = 'scoped memory for gaussian_multi_score_forward.1']
    #allocation5 [shape = 'u8[4096]{0}', space=vmem, size = 0x1000, scoped, tag = 'input window, operand 4, single buffered']
    #allocation6 [shape = 's32[1]{0}', space=sflag, size = 0x4, scoped, tag = 'scoped memory for gaussian_multi_score_forward.1']
    #allocation7 [shape = 'u8[512]{0}', space=vmem, size = 0x400, scoped, tag = 'output window, operand 0, single buffered']
    %10 = vsyncpa [#allocation3], 0
    %11 = vsyncpa [#allocation6], 0
    %12 = vsyncpa [#allocation4], 0
    // Predicated region
    $region2: #{gaussian_multi_score_forward.1} parent=1 // pred_check
      _
    $region3: #{gaussian_multi_score_forward.1} parent=1 // pred_check_branch
      %14 = sbr.rel (0) target = $region5
    $region4: #{gaussian_multi_score_forward.1} parent=1 // pred_region
      _
    $region5: #{gaussian_multi_score_forward.1} parent=1 // pred_fallthru
      _
    // Predicated region
    $region6: #{gaussian_multi_score_forward.1} parent=1 // pred_check
      _
    $region7: #{gaussian_multi_score_forward.1} parent=1 // pred_check_branch
      %16 = sbr.rel (0) target = $region9
    $region8: #{gaussian_multi_score_forward.1} parent=1 // pred_region
      _
    $region9: #{gaussian_multi_score_forward.1} parent=1 // pred_fallthru
      _
    // Predicated region
    $region10: #{gaussian_multi_score_forward.1} parent=1 // pred_check
      _
    $region11: #{gaussian_multi_score_forward.1} parent=1 // pred_check_branch
      %18 = sbr.rel (0) target = $region13
    $region12: #{gaussian_multi_score_forward.1} parent=1 // pred_region
      _
    $region13: #{gaussian_multi_score_forward.1} parent=1 // pred_fallthru
      _
    // Predicated region
    $region14: #{gaussian_multi_score_forward.1} parent=1 // pred_check
      _
    $region15: #{gaussian_multi_score_forward.1} parent=1 // pred_check_branch
      %20 = sbr.rel (0) target = $region17
    $region16: #{gaussian_multi_score_forward.1} parent=1 // pred_region
      %22 = vsyncadd [#allocation3], 0
      %s24 = sshll.u32 %s3, 4
      %s25 = int_to_ptr.hbm [resolvable:$true] %s24
      %s26 = sshll.u32 [#allocation2], 4
      %s27 = int_to_ptr.vmem [resolvable:$true] %s26
      %29 = dma.hbm_to_vmem [thread:$0]  %s25, 128, %s27, [#allocation3]
    $region17: #{gaussian_multi_score_forward.1} parent=1 // pred_fallthru
      _
    // Predicated region
    $region18: #{gaussian_multi_score_forward.1} parent=1 // pred_check
      _
    $region19: #{gaussian_multi_score_forward.1} parent=1 // pred_check_branch
      %31 = sbr.rel (0) target = $region21
    $region20: #{gaussian_multi_score_forward.1} parent=1 // pred_region
      %33 = vsyncadd [#allocation6], 0
      %s35 = sshll.u32 %s4, 4
      %s36 = int_to_ptr.hbm [resolvable:$true] %s35
      %s37 = sshll.u32 [#allocation5], 4
      %s38 = int_to_ptr.vmem [resolvable:$true] %s37
      %40 = dma.hbm_to_vmem [thread:$0]  %s36, 128, %s38, [#allocation6]
    $region21: #{gaussian_multi_score_forward.1} parent=1 // pred_fallthru
      _
    // Predicated region
    $region22: #{gaussian_multi_score_forward.1} parent=1 // pred_check
      _
    $region23: #{gaussian_multi_score_forward.1} parent=1 // pred_check_branch
      %42 = sbr.rel (0) target = $region25
    $region24: #{gaussian_multi_score_forward.1} parent=1 // pred_region
      %44 = dma.done [#allocation3], 128
    $region25: #{gaussian_multi_score_forward.1} parent=1 // pred_fallthru
      _
    // Predicated region
    $region26: #{gaussian_multi_score_forward.1} parent=1 // pred_check
      _
    $region27: #{gaussian_multi_score_forward.1} parent=1 // pred_check_branch
      %46 = sbr.rel (0) target = $region29
    $region28: #{gaussian_multi_score_forward.1} parent=1 // pred_region
      %48 = dma.done [#allocation6], 128
    $region29: #{gaussian_multi_score_forward.1} parent=1 // pred_fallthru
      _
    %v49 = vlaneseq
    %v50 = vshrl.u32 %v49, 7
    %v51 = vlaneseq
    %v52 = vand.u32 %v51, 127
    %vm53 = vcmp.eq.s32.totalorder %v50, %v52
    %v54 = vld [vmem:[%s0] sm:$0x1]
    %v55 = vld [vmem:[%s1] sm:$0x1]
    %v56 = vld [vmem:[%s2] sm:$0x1]
    %v57 = vld [vmem:[#allocation2] sm:$0xff]
    %v58 = vld [vmem:[#allocation5] sm:$0xff]
    %v60 = vperm.slane %v54, 0
    %v62 = vsel %vm53, %v60, 0.0
    %vm63 = vcmask 64512
    %v64 = vsel %vm63, %v62, 0.0
    %65 = vadd.xlane.f32.xlu0 %v64
    %v66 = vpop.xlane.xlu0 %65
    %v68 = vperm.slane %v55, 0
    %v70 = vsel %vm53, %v68, 0.0
    %v71 = vsel %vm63, %v70, 0.0
    %72 = vadd.xlane.f32.xlu0 %v71
    %v73 = vpop.xlane.xlu0 %72
    %v74 = vmul.f32 %v57, %v60
    %v75 = vsel %vm63, %v74, 0.0
    %76 = vadd.xlane.f32.xlu0 %v75
    %v77 = vpop.xlane.xlu0 %76
    %v78 = vmul.f32 %v58, %v68
    %v79 = vsel %vm63, %v78, 0.0
    %80 = vadd.xlane.f32.xlu0 %v79
    %v81 = vpop.xlane.xlu0 %80
    %v82 = vsel %vm53, %v57, 0.0
    %v83 = vsel %vm63, %v82, 0.0
    %v84 = vrot.slane %v83, 4
    %v85 = vadd.f32 %v83, %v84
    %v86 = vrot.slane %v85, 2
    %v87 = vadd.f32 %v85, %v86
    %v88 = vrot.slane %v87, 1
    %v89 = vadd.f32 %v87, %v88
    %v90 = vsel %vm53, %v58, 0.0
    %v91 = vsel %vm63, %v90, 0.0
    %v92 = vrot.slane %v91, 4
    %v93 = vadd.f32 %v91, %v92
    %v94 = vrot.slane %v93, 2
    %v95 = vadd.f32 %v93, %v94
    %v96 = vrot.slane %v95, 1
    %v97 = vadd.f32 %v95, %v96
    %v98 = vmul.f32 %v89, %v89
    %v99 = vlog2.pop %v98
    %v100 = vmul.f32 %v99, 0.6931472
    %v101 = vsel %vm63, %v100, 0.0
    %102 = vadd.xlane.f32.xlu0 %v101
    %v103 = vpop.xlane.xlu0 %102
    %v104 = vmul.f32 %v97, %v97
    %v105 = vlog2.pop %v104
    %v106 = vmul.f32 %v105, 0.6931472
    %v107 = vsel %vm63, %v106, 0.0
    %108 = vadd.xlane.f32.xlu0 %v107
    %v109 = vpop.xlane.xlu0 %108
    %v110 = vmul.f32 %v66, %v77
    %v111 = vrot.slane %v110, 4
    %v112 = vadd.f32 %v110, %v111
    %v113 = vrot.slane %v112, 2
    %v114 = vadd.f32 %v112, %v113
    %v115 = vrot.slane %v114, 1
    %v116 = vadd.f32 %v114, %v115
    %v117 = vmul.f32 %v73, %v81
    %v118 = vrot.slane %v117, 4
    %v119 = vadd.f32 %v117, %v118
    %v120 = vrot.slane %v119, 2
    %v121 = vadd.f32 %v119, %v120
    %v122 = vrot.slane %v121, 1
    %v123 = vadd.f32 %v121, %v122
    %v124 = vsub.f32 14.703016, %v103
    %v125 = vadd.f32 %v124, %v116
    %v126 = vmul.f32 %v125, -0.5
    %v127 = vsub.f32 14.703016, %v109
    %v128 = vadd.f32 %v127, %v123
    %v129 = vmul.f32 %v128, -0.5
    %v130 = vadd.f32 %v126, %v129
    %v131 = vadd.f32 %v57, %v58
    %v132 = vadd.f32 %v77, %v81
    %v133 = vsel %vm53, 1.0, 0.0
    %vm134 = vcmp.eq.s32.totalorder %v50, 0
    %vm135 = vcmp.eq.s32.totalorder %v52, 0
    %v136 = vsel %vm134, %v131, 0.0
    %v137 = vsel %vm63, %v136, 0.0
    %v138 = vrot.slane %v137, 4
    %v139 = vadd.f32 %v137, %v138
    %v140 = vrot.slane %v139, 2
    %v141 = vadd.f32 %v139, %v140
    %v142 = vrot.slane %v141, 1
    %v143 = vadd.f32 %v141, %v142
    %v144 = vsel %vm134, %v133, 0.0
    %v145 = vsel %vm63, %v144, 0.0
    %v146 = vrot.slane %v145, 4
    %v147 = vadd.f32 %v145, %v146
    %v148 = vrot.slane %v147, 2
    %v149 = vadd.f32 %v147, %v148
    %v150 = vrot.slane %v149, 1
    %v151 = vadd.f32 %v149, %v150
    %v152 = vsel %vm135, %v143, 0.0
    %v153 = vsel %vm63, %v152, 0.0
    %154 = vadd.xlane.f32.xlu0 %v153
    %v155 = vpop.xlane.xlu0 %154
    %v156 = vrcp.pop %v155
    %v157 = vmul.f32 %v155, %v156
    %v158 = vsub.f32 1.0, %v157
    %v159 = vmul.f32 %v156, %v158
    %v160 = vadd.f32 %v156, %v159
    %vm161 = vweird.f32 %v155
    %vm162 = vweird.f32 %v156
    %vm163 = vmor %vm161, %vm162
    %v164 = vsel %vm163, %v156, %v160
    %v165 = vand.u32 2147483647, %v155
    %vm166 = vcmp.eq.f32.partialorder %v165, 8.507059e+37
    %v167 = vand.u32 %v155, 2147483648
    %v168 = vor.u32 1.1754944e-38, %v167
    %v169 = vsel %vm166, %v168, %v164
    %v170 = vmul.f32 1.0, %v169
    %v171 = vmul.f32 %v143, %v170
    %v172 = vmul.f32 %v151, %v170
    %v173 = vsel %vm135, %v131, 0.0
    %v174 = vsel %vm63, %v173, 0.0
    %175 = vadd.xlane.f32.xlu0 %v174
    %v176 = vpop.xlane.xlu0 %175
    %v177 = vmul.f32 %v176, %v171
    %v178 = vsub.f32 %v131, %v177
    %v179 = vsel %vm134, %v171, %v178
    %v180 = vmul.f32 %v176, %v172
    %v181 = vsub.f32 %v133, %v180
    %v182 = vsel %vm134, %v172, %v181
    %vm183 = vcmp.eq.s32.totalorder %v50, 1
    %vm184 = vcmp.eq.s32.totalorder %v52, 1
    %v185 = vsel %vm183, %v179, 0.0
    %v186 = vsel %vm63, %v185, 0.0
    %v187 = vrot.slane %v186, 4
    %v188 = vadd.f32 %v186, %v187
    %v189 = vrot.slane %v188, 2
    %v190 = vadd.f32 %v188, %v189
    %v191 = vrot.slane %v190, 1
    %v192 = vadd.f32 %v190, %v191
    %v193 = vsel %vm183, %v182, 0.0
    %v194 = vsel %vm63, %v193, 0.0
    %v195 = vrot.slane %v194, 4
    %v196 = vadd.f32 %v194, %v195
    %v197 = vrot.slane %v196, 2
    %v198 = vadd.f32 %v196, %v197
    %v199 = vrot.slane %v198, 1
    %v200 = vadd.f32 %v198, %v199
    %v201 = vsel %vm184, %v192, 0.0
    %v202 = vsel %vm63, %v201, 0.0
    %203 = vadd.xlane.f32.xlu0 %v202
    %v204 = vpop.xlane.xlu0 %203
    %v205 = vrcp.pop %v204
    %v206 = vmul.f32 %v204, %v205
    %v207 = vsub.f32 1.0, %v206
    %v208 = vmul.f32 %v205, %v207
    %v209 = vadd.f32 %v205, %v208
    %vm210 = vweird.f32 %v204
    %vm211 = vweird.f32 %v205
    %vm212 = vmor %vm210, %vm211
    %v213 = vsel %vm212, %v205, %v209
    %v214 = vand.u32 2147483647, %v204
    %vm215 = vcmp.eq.f32.partialorder %v214, 8.507059e+37
    %v216 = vand.u32 %v204, 2147483648
    %v217 = vor.u32 1.1754944e-38, %v216
    %v218 = vsel %vm215, %v217, %v213
    %v219 = vmul.f32 1.0, %v218
    %v220 = vmul.f32 %v192, %v219
    %v221 = vmul.f32 %v200, %v219
    %v222 = vsel %vm184, %v179, 0.0
    %v223 = vsel %vm63, %v222, 0.0
    %224 = vadd.xlane.f32.xlu0 %v223
    %v225 = vpop.xlane.xlu0 %224
    %v226 = vmul.f32 %v225, %v220
    %v227 = vsub.f32 %v179, %v226
    %v228 = vsel %vm183, %v220, %v227
    %v229 = vmul.f32 %v225, %v221
    %v230 = vsub.f32 %v182, %v229
    %v231 = vsel %vm183, %v221, %v230
    %vm232 = vcmp.eq.s32.totalorder %v50, 2
    %vm233 = vcmp.eq.s32.totalorder %v52, 2
    %v234 = vsel %vm232, %v228, 0.0
    %v235 = vsel %vm63, %v234, 0.0
    %v236 = vrot.slane %v235, 4
    %v237 = vadd.f32 %v235, %v236
    %v238 = vrot.slane %v237, 2
    %v239 = vadd.f32 %v237, %v238
    %v240 = vrot.slane %v239, 1
    %v241 = vadd.f32 %v239, %v240
    %v242 = vsel %vm232, %v231, 0.0
    %v243 = vsel %vm63, %v242, 0.0
    %v244 = vrot.slane %v243, 4
    %v245 = vadd.f32 %v243, %v244
    %v246 = vrot.slane %v245, 2
    %v247 = vadd.f32 %v245, %v246
    %v248 = vrot.slane %v247, 1
    %v249 = vadd.f32 %v247, %v248
    %v250 = vsel %vm233, %v241, 0.0
    %v251 = vsel %vm63, %v250, 0.0
    %252 = vadd.xlane.f32.xlu0 %v251
    %v253 = vpop.xlane.xlu0 %252
    %v254 = vrcp.pop %v253
    %v255 = vmul.f32 %v253, %v254
    %v256 = vsub.f32 1.0, %v255
    %v257 = vmul.f32 %v254, %v256
    %v258 = vadd.f32 %v254, %v257
    %vm259 = vweird.f32 %v253
    %vm260 = vweird.f32 %v254
    %vm261 = vmor %vm259, %vm260
    %v262 = vsel %vm261, %v254, %v258
    %v263 = vand.u32 2147483647, %v253
    %vm264 = vcmp.eq.f32.partialorder %v263, 8.507059e+37
    %v265 = vand.u32 %v253, 2147483648
    %v266 = vor.u32 1.1754944e-38, %v265
    %v267 = vsel %vm264, %v266, %v262
    %v268 = vmul.f32 1.0, %v267
    %v269 = vmul.f32 %v241, %v268
    %v270 = vmul.f32 %v249, %v268
    %v271 = vsel %vm233, %v228, 0.0
    %v272 = vsel %vm63, %v271, 0.0
    %273 = vadd.xlane.f32.xlu0 %v272
    %v274 = vpop.xlane.xlu0 %273
    %v275 = vmul.f32 %v274, %v269
    %v276 = vsub.f32 %v228, %v275
    %v277 = vsel %vm232, %v269, %v276
    %v278 = vmul.f32 %v274, %v270
    %v279 = vsub.f32 %v231, %v278
    %v280 = vsel %vm232, %v270, %v279
    %vm281 = vcmp.eq.s32.totalorder %v50, 3
    %vm282 = vcmp.eq.s32.totalorder %v52, 3
    %v283 = vsel %vm281, %v277, 0.0
    %v284 = vsel %vm63, %v283, 0.0
    %v285 = vrot.slane %v284, 4
    %v286 = vadd.f32 %v284, %v285
    %v287 = vrot.slane %v286, 2
    %v288 = vadd.f32 %v286, %v287
    %v289 = vrot.slane %v288, 1
    %v290 = vadd.f32 %v288, %v289
    %v291 = vsel %vm281, %v280, 0.0
    %v292 = vsel %vm63, %v291, 0.0
    %v293 = vrot.slane %v292, 4
    %v294 = vadd.f32 %v292, %v293
    %v295 = vrot.slane %v294, 2
    %v296 = vadd.f32 %v294, %v295
    %v297 = vrot.slane %v296, 1
    %v298 = vadd.f32 %v296, %v297
    %v299 = vsel %vm282, %v290, 0.0
    %v300 = vsel %vm63, %v299, 0.0
    %301 = vadd.xlane.f32.xlu0 %v300
    %v302 = vpop.xlane.xlu0 %301
    %v303 = vrcp.pop %v302
    %v304 = vmul.f32 %v302, %v303
    %v305 = vsub.f32 1.0, %v304
    %v306 = vmul.f32 %v303, %v305
    %v307 = vadd.f32 %v303, %v306
    %vm308 = vweird.f32 %v302
    %vm309 = vweird.f32 %v303
    %vm310 = vmor %vm308, %vm309
    %v311 = vsel %vm310, %v303, %v307
    %v312 = vand.u32 2147483647, %v302
    %vm313 = vcmp.eq.f32.partialorder %v312, 8.507059e+37
    %v314 = vand.u32 %v302, 2147483648
    %v315 = vor.u32 1.1754944e-38, %v314
    %v316 = vsel %vm313, %v315, %v311
    %v317 = vmul.f32 1.0, %v316
    %v318 = vmul.f32 %v290, %v317
    %v319 = vmul.f32 %v298, %v317
    %v320 = vsel %vm282, %v277, 0.0
    %v321 = vsel %vm63, %v320, 0.0
    %322 = vadd.xlane.f32.xlu0 %v321
    %v323 = vpop.xlane.xlu0 %322
    %v324 = vmul.f32 %v323, %v318
    %v325 = vsub.f32 %v277, %v324
    %v326 = vsel %vm281, %v318, %v325
    %v327 = vmul.f32 %v323, %v319
    %v328 = vsub.f32 %v280, %v327
    %v329 = vsel %vm281, %v319, %v328
    %vm330 = vcmp.eq.s32.totalorder %v50, 4
    %vm331 = vcmp.eq.s32.totalorder %v52, 4
    %v332 = vsel %vm330, %v326, 0.0
    %v333 = vsel %vm63, %v332, 0.0
    %v334 = vrot.slane %v333, 4
    %v335 = vadd.f32 %v333, %v334
    %v336 = vrot.slane %v335, 2
    %v337 = vadd.f32 %v335, %v336
    %v338 = vrot.slane %v337, 1
    %v339 = vadd.f32 %v337, %v338
    %v340 = vsel %vm330, %v329, 0.0
    %v341 = vsel %vm63, %v340, 0.0
    %v342 = vrot.slane %v341, 4
    %v343 = vadd.f32 %v341, %v342
    %v344 = vrot.slane %v343, 2
    %v345 = vadd.f32 %v343, %v344
    %v346 = vrot.slane %v345, 1
    %v347 = vadd.f32 %v345, %v346
    %v348 = vsel %vm331, %v339, 0.0
    %v349 = vsel %vm63, %v348, 0.0
    %350 = vadd.xlane.f32.xlu0 %v349
    %v351 = vpop.xlane.xlu0 %350
    %v352 = vrcp.pop %v351
    %v353 = vmul.f32 %v351, %v352
    %v354 = vsub.f32 1.0, %v353
    %v355 = vmul.f32 %v352, %v354
    %v356 = vadd.f32 %v352, %v355
    %vm357 = vweird.f32 %v351
    %vm358 = vweird.f32 %v352
    %vm359 = vmor %vm357, %vm358
    %v360 = vsel %vm359, %v352, %v356
    %v361 = vand.u32 2147483647, %v351
    %vm362 = vcmp.eq.f32.partialorder %v361, 8.507059e+37
    %v363 = vand.u32 %v351, 2147483648
    %v364 = vor.u32 1.1754944e-38, %v363
    %v365 = vsel %vm362, %v364, %v360
    %v366 = vmul.f32 1.0, %v365
    %v367 = vmul.f32 %v339, %v366
    %v368 = vmul.f32 %v347, %v366
    %v369 = vsel %vm331, %v326, 0.0
    %v370 = vsel %vm63, %v369, 0.0
    %371 = vadd.xlane.f32.xlu0 %v370
    %v372 = vpop.xlane.xlu0 %371
    %v373 = vmul.f32 %v372, %v367
    %v374 = vsub.f32 %v326, %v373
    %v375 = vsel %vm330, %v367, %v374
    %v376 = vmul.f32 %v372, %v368
    %v377 = vsub.f32 %v329, %v376
    %v378 = vsel %vm330, %v368, %v377
    %vm379 = vcmp.eq.s32.totalorder %v50, 5
    %vm380 = vcmp.eq.s32.totalorder %v52, 5
    %v381 = vsel %vm379, %v375, 0.0
    %v382 = vsel %vm63, %v381, 0.0
    %v383 = vrot.slane %v382, 4
    %v384 = vadd.f32 %v382, %v383
    %v385 = vrot.slane %v384, 2
    %v386 = vadd.f32 %v384, %v385
    %v387 = vrot.slane %v386, 1
    %v388 = vadd.f32 %v386, %v387
    %v389 = vsel %vm379, %v378, 0.0
    %v390 = vsel %vm63, %v389, 0.0
    %v391 = vrot.slane %v390, 4
    %v392 = vadd.f32 %v390, %v391
    %v393 = vrot.slane %v392, 2
    %v394 = vadd.f32 %v392, %v393
    %v395 = vrot.slane %v394, 1
    %v396 = vadd.f32 %v394, %v395
    %v397 = vsel %vm380, %v388, 0.0
    %v398 = vsel %vm63, %v397, 0.0
    %399 = vadd.xlane.f32.xlu0 %v398
    %v400 = vpop.xlane.xlu0 %399
    %v401 = vrcp.pop %v400
    %v402 = vmul.f32 %v400, %v401
    %v403 = vsub.f32 1.0, %v402
    %v404 = vmul.f32 %v401, %v403
    %v405 = vadd.f32 %v401, %v404
    %vm406 = vweird.f32 %v400
    %vm407 = vweird.f32 %v401
    %vm408 = vmor %vm406, %vm407
    %v409 = vsel %vm408, %v401, %v405
    %v410 = vand.u32 2147483647, %v400
    %vm411 = vcmp.eq.f32.partialorder %v410, 8.507059e+37
    %v412 = vand.u32 %v400, 2147483648
    %v413 = vor.u32 1.1754944e-38, %v412
    %v414 = vsel %vm411, %v413, %v409
    %v415 = vmul.f32 1.0, %v414
    %v416 = vmul.f32 %v388, %v415
    %v417 = vmul.f32 %v396, %v415
    %v418 = vsel %vm380, %v375, 0.0
    %v419 = vsel %vm63, %v418, 0.0
    %420 = vadd.xlane.f32.xlu0 %v419
    %v421 = vpop.xlane.xlu0 %420
    %v422 = vmul.f32 %v421, %v416
    %v423 = vsub.f32 %v375, %v422
    %v424 = vsel %vm379, %v416, %v423
    %v425 = vmul.f32 %v421, %v417
    %v426 = vsub.f32 %v378, %v425
    %v427 = vsel %vm379, %v417, %v426
    %vm428 = vcmp.eq.s32.totalorder %v50, 6
    %vm429 = vcmp.eq.s32.totalorder %v52, 6
    %v430 = vsel %vm428, %v424, 0.0
    %v431 = vsel %vm63, %v430, 0.0
    %v432 = vrot.slane %v431, 4
    %v433 = vadd.f32 %v431, %v432
    %v434 = vrot.slane %v433, 2
    %v435 = vadd.f32 %v433, %v434
    %v436 = vrot.slane %v435, 1
    %v437 = vadd.f32 %v435, %v436
    %v438 = vsel %vm428, %v427, 0.0
    %v439 = vsel %vm63, %v438, 0.0
    %v440 = vrot.slane %v439, 4
    %v441 = vadd.f32 %v439, %v440
    %v442 = vrot.slane %v441, 2
    %v443 = vadd.f32 %v441, %v442
    %v444 = vrot.slane %v443, 1
    %v445 = vadd.f32 %v443, %v444
    %v446 = vsel %vm429, %v437, 0.0
    %v447 = vsel %vm63, %v446, 0.0
    %448 = vadd.xlane.f32.xlu0 %v447
    %v449 = vpop.xlane.xlu0 %448
    %v450 = vrcp.pop %v449
    %v451 = vmul.f32 %v449, %v450
    %v452 = vsub.f32 1.0, %v451
    %v453 = vmul.f32 %v450, %v452
    %v454 = vadd.f32 %v450, %v453
    %vm455 = vweird.f32 %v449
    %vm456 = vweird.f32 %v450
    %vm457 = vmor %vm455, %vm456
    %v458 = vsel %vm457, %v450, %v454
    %v459 = vand.u32 2147483647, %v449
    %vm460 = vcmp.eq.f32.partialorder %v459, 8.507059e+37
    %v461 = vand.u32 %v449, 2147483648
    %v462 = vor.u32 1.1754944e-38, %v461
    %v463 = vsel %vm460, %v462, %v458
    %v464 = vmul.f32 1.0, %v463
    %v465 = vmul.f32 %v437, %v464
    %v466 = vmul.f32 %v445, %v464
    %v467 = vsel %vm429, %v424, 0.0
    %v468 = vsel %vm63, %v467, 0.0
    %469 = vadd.xlane.f32.xlu0 %v468
    %v470 = vpop.xlane.xlu0 %469
    %v471 = vmul.f32 %v470, %v465
    %v472 = vsub.f32 %v424, %v471
    %v473 = vsel %vm428, %v465, %v472
    %v474 = vmul.f32 %v470, %v466
    %v475 = vsub.f32 %v427, %v474
    %v476 = vsel %vm428, %v466, %v475
    %vm477 = vcmp.eq.s32.totalorder %v50, 7
    %vm478 = vcmp.eq.s32.totalorder %v52, 7
    %v479 = vsel %vm477, %v473, 0.0
    %v480 = vsel %vm63, %v479, 0.0
    %v481 = vrot.slane %v480, 4
    %v482 = vadd.f32 %v480, %v481
    %v483 = vrot.slane %v482, 2
    %v484 = vadd.f32 %v482, %v483
    %v485 = vrot.slane %v484, 1
    %v486 = vadd.f32 %v484, %v485
    %v487 = vsel %vm477, %v476, 0.0
    %v488 = vsel %vm63, %v487, 0.0
    %v489 = vrot.slane %v488, 4
    %v490 = vadd.f32 %v488, %v489
    %v491 = vrot.slane %v490, 2
    %v492 = vadd.f32 %v490, %v491
    %v493 = vrot.slane %v492, 1
    %v494 = vadd.f32 %v492, %v493
    %v495 = vsel %vm478, %v486, 0.0
    %v496 = vsel %vm63, %v495, 0.0
    %497 = vadd.xlane.f32.xlu0 %v496
    %v498 = vpop.xlane.xlu0 %497
    %v499 = vrcp.pop %v498
    %v500 = vmul.f32 %v498, %v499
    %v501 = vsub.f32 1.0, %v500
    %v502 = vmul.f32 %v499, %v501
    %v503 = vadd.f32 %v499, %v502
    %vm504 = vweird.f32 %v498
    %vm505 = vweird.f32 %v499
    %vm506 = vmor %vm504, %vm505
    %v507 = vsel %vm506, %v499, %v503
    %v508 = vand.u32 2147483647, %v498
    %vm509 = vcmp.eq.f32.partialorder %v508, 8.507059e+37
    %v510 = vand.u32 %v498, 2147483648
    %v511 = vor.u32 1.1754944e-38, %v510
    %v512 = vsel %vm509, %v511, %v507
    %v513 = vmul.f32 1.0, %v512
    %v514 = vmul.f32 %v494, %v513
    %v515 = vsel %vm478, %v473, 0.0
    %v516 = vsel %vm63, %v515, 0.0
    %517 = vadd.xlane.f32.xlu0 %v516
    %v518 = vpop.xlane.xlu0 %517
    %v519 = vmul.f32 %v518, %v514
    %v520 = vsub.f32 %v476, %v519
    %v521 = vsel %vm477, %v514, %v520
    %v522 = vsel %vm135, %v521, 0.0
    %v523 = vsel %vm63, %v522, 0.0
    %524 = vadd.xlane.f32.xlu0 %v523
    %v525 = vpop.xlane.xlu0 %524
    %v526 = vsel %vm53, %v525, 0.0
    %v527 = vsel %vm63, %v526, 0.0
    %v528 = vrot.slane %v527, 4
    %v529 = vadd.f32 %v527, %v528
    %v530 = vrot.slane %v529, 2
    %v531 = vadd.f32 %v529, %v530
    %v532 = vrot.slane %v531, 1
    %v533 = vadd.f32 %v531, %v532
    %v534 = vsel %vm134, %v533, 0.0
    %v535 = vsel %vm184, %v521, 0.0
    %v536 = vsel %vm63, %v535, 0.0
    %537 = vadd.xlane.f32.xlu0 %v536
    %v538 = vpop.xlane.xlu0 %537
    %v539 = vsel %vm53, %v538, 0.0
    %v540 = vsel %vm63, %v539, 0.0
    %v541 = vrot.slane %v540, 4
    %v542 = vadd.f32 %v540, %v541
    %v543 = vrot.slane %v542, 2
    %v544 = vadd.f32 %v542, %v543
    %v545 = vrot.slane %v544, 1
    %v546 = vadd.f32 %v544, %v545
    %v547 = vsel %vm183, %v546, %v534
    %v548 = vsel %vm233, %v521, 0.0
    %v549 = vsel %vm63, %v548, 0.0
    %550 = vadd.xlane.f32.xlu0 %v549
    %v551 = vpop.xlane.xlu0 %550
    %v552 = vsel %vm53, %v551, 0.0
    %v553 = vsel %vm63, %v552, 0.0
    %v554 = vrot.slane %v553, 4
    %v555 = vadd.f32 %v553, %v554
    %v556 = vrot.slane %v555, 2
    %v557 = vadd.f32 %v555, %v556
    %v558 = vrot.slane %v557, 1
    %v559 = vadd.f32 %v557, %v558
    %v560 = vsel %vm232, %v559, %v547
    %v561 = vsel %vm282, %v521, 0.0
    %v562 = vsel %vm63, %v561, 0.0
    %563 = vadd.xlane.f32.xlu0 %v562
    %v564 = vpop.xlane.xlu0 %563
    %v565 = vsel %vm53, %v564, 0.0
    %v566 = vsel %vm63, %v565, 0.0
    %v567 = vrot.slane %v566, 4
    %v568 = vadd.f32 %v566, %v567
    %v569 = vrot.slane %v568, 2
    %v570 = vadd.f32 %v568, %v569
    %v571 = vrot.slane %v570, 1
    %v572 = vadd.f32 %v570, %v571
    %v573 = vsel %vm281, %v572, %v560
    %v574 = vsel %vm331, %v521, 0.0
    %v575 = vsel %vm63, %v574, 0.0
    %576 = vadd.xlane.f32.xlu0 %v575
    %v577 = vpop.xlane.xlu0 %576
    %v578 = vsel %vm53, %v577, 0.0
    %v579 = vsel %vm63, %v578, 0.0
    %v580 = vrot.slane %v579, 4
    %v581 = vadd.f32 %v579, %v580
    %v582 = vrot.slane %v581, 2
    %v583 = vadd.f32 %v581, %v582
    %v584 = vrot.slane %v583, 1
    %v585 = vadd.f32 %v583, %v584
    %v586 = vsel %vm330, %v585, %v573
    %v587 = vsel %vm380, %v521, 0.0
    %v588 = vsel %vm63, %v587, 0.0
    %589 = vadd.xlane.f32.xlu0 %v588
    %v590 = vpop.xlane.xlu0 %589
    %v591 = vsel %vm53, %v590, 0.0
    %v592 = vsel %vm63, %v591, 0.0
    %v593 = vrot.slane %v592, 4
    %v594 = vadd.f32 %v592, %v593
    %v595 = vrot.slane %v594, 2
    %v596 = vadd.f32 %v594, %v595
    %v597 = vrot.slane %v596, 1
    %v598 = vadd.f32 %v596, %v597
    %v599 = vsel %vm379, %v598, %v586
    %v600 = vsel %vm429, %v521, 0.0
    %v601 = vsel %vm63, %v600, 0.0
    %602 = vadd.xlane.f32.xlu0 %v601
    %v603 = vpop.xlane.xlu0 %602
    %v604 = vsel %vm53, %v603, 0.0
    %v605 = vsel %vm63, %v604, 0.0
    %v606 = vrot.slane %v605, 4
    %v607 = vadd.f32 %v605, %v606
    %v608 = vrot.slane %v607, 2
    %v609 = vadd.f32 %v607, %v608
    %v610 = vrot.slane %v609, 1
    %v611 = vadd.f32 %v609, %v610
    %v612 = vsel %vm428, %v611, %v599
    %v613 = vsel %vm478, %v521, 0.0
    %v614 = vsel %vm63, %v613, 0.0
    %615 = vadd.xlane.f32.xlu0 %v614
    %v616 = vpop.xlane.xlu0 %615
    %v617 = vsel %vm53, %v616, 0.0
    %v618 = vsel %vm63, %v617, 0.0
    %v619 = vrot.slane %v618, 4
    %v620 = vadd.f32 %v618, %v619
    %v621 = vrot.slane %v620, 2
    %v622 = vadd.f32 %v620, %v621
    %v623 = vrot.slane %v622, 1
    %v624 = vadd.f32 %v622, %v623
    %v625 = vsel %vm477, %v624, %v612
    %vm626 = vcmp.le.s32.totalorder %v50, %v52
    %v627 = vsel %vm626, %v521, %v625
    %v628 = vsel %vm134, %v627, 0.0
    %v629 = vsel %vm63, %v628, 0.0
    %v630 = vrot.slane %v629, 4
    %v631 = vadd.f32 %v629, %v630
    %v632 = vrot.slane %v631, 2
    %v633 = vadd.f32 %v631, %v632
    %v634 = vrot.slane %v633, 1
    %v635 = vadd.f32 %v633, %v634
    %v636 = vsel %vm135, %v635, 0.0
    %v637 = vsel %vm63, %v636, 0.0
    %638 = vadd.xlane.f32.xlu0 %v637
    %v639 = vpop.xlane.xlu0 %638
    %v640 = vrcp.pop %v639
    %v641 = vmul.f32 %v639, %v640
    %v642 = vsub.f32 1.0, %v641
    %v643 = vmul.f32 %v640, %v642
    %v644 = vadd.f32 %v640, %v643
    %vm645 = vweird.f32 %v639
    %vm646 = vweird.f32 %v640
    %vm647 = vmor %vm645, %vm646
    %v648 = vsel %vm647, %v640, %v644
    %v649 = vand.u32 2147483647, %v639
    %vm650 = vcmp.eq.f32.partialorder %v649, 8.507059e+37
    %v651 = vand.u32 %v639, 2147483648
    %v652 = vor.u32 1.1754944e-38, %v651
    %v653 = vsel %vm650, %v652, %v648
    %v654 = vmul.f32 1.0, %v653
    %v655 = vmul.f32 %v635, %v654
    %v656 = vmul.f32 %v151, %v654
    %v657 = vsel %vm135, %v627, 0.0
    %v658 = vsel %vm63, %v657, 0.0
    %659 = vadd.xlane.f32.xlu0 %v658
    %v660 = vpop.xlane.xlu0 %659
    %v661 = vmul.f32 %v660, %v655
    %v662 = vsub.f32 %v627, %v661
    %v663 = vsel %vm134, %v655, %v662
    %v664 = vmul.f32 %v660, %v656
    %v665 = vsub.f32 %v133, %v664
    %v666 = vsel %vm134, %v656, %v665
    %v667 = vlog2.pop %v639
    %v668 = vmul.f32 %v667, 0.6931472
    %v669 = vadd.f32 %v668, 0.0
    %v670 = vadd.f32 %v639, 0.0
    %v671 = vsel %vm183, %v663, 0.0
    %v672 = vsel %vm63, %v671, 0.0
    %v673 = vrot.slane %v672, 4
    %v674 = vadd.f32 %v672, %v673
    %v675 = vrot.slane %v674, 2
    %v676 = vadd.f32 %v674, %v675
    %v677 = vrot.slane %v676, 1
    %v678 = vadd.f32 %v676, %v677
    %v679 = vsel %vm183, %v666, 0.0
    %v680 = vsel %vm63, %v679, 0.0
    %v681 = vrot.slane %v680, 4
    %v682 = vadd.f32 %v680, %v681
    %v683 = vrot.slane %v682, 2
    %v684 = vadd.f32 %v682, %v683
    %v685 = vrot.slane %v684, 1
    %v686 = vadd.f32 %v684, %v685
    %v687 = vsel %vm184, %v678, 0.0
    %v688 = vsel %vm63, %v687, 0.0
    %689 = vadd.xlane.f32.xlu0 %v688
    %v690 = vpop.xlane.xlu0 %689
    %v691 = vrcp.pop %v690
    %v692 = vmul.f32 %v690, %v691
    %v693 = vsub.f32 1.0, %v692
    %v694 = vmul.f32 %v691, %v693
    %v695 = vadd.f32 %v691, %v694
    %vm696 = vweird.f32 %v690
    %vm697 = vweird.f32 %v691
    %vm698 = vmor %vm696, %vm697
    %v699 = vsel %vm698, %v691, %v695
    %v700 = vand.u32 2147483647, %v690
    %vm701 = vcmp.eq.f32.partialorder %v700, 8.507059e+37
    %v702 = vand.u32 %v690, 2147483648
    %v703 = vor.u32 1.1754944e-38, %v702
    %v704 = vsel %vm701, %v703, %v699
    %v705 = vmul.f32 1.0, %v704
    %v706 = vmul.f32 %v678, %v705
    %v707 = vmul.f32 %v686, %v705
    %v708 = vsel %vm184, %v663, 0.0
    %v709 = vsel %vm63, %v708, 0.0
    %710 = vadd.xlane.f32.xlu0 %v709
    %v711 = vpop.xlane.xlu0 %710
    %v712 = vmul.f32 %v711, %v706
    %v713 = vsub.f32 %v663, %v712
    %v714 = vsel %vm183, %v706, %v713
    %v715 = vmul.f32 %v711, %v707
    %v716 = vsub.f32 %v666, %v715
    %v717 = vsel %vm183, %v707, %v716
    %v718 = vlog2.pop %v690
    %v719 = vmul.f32 %v718, 0.6931472
    %v720 = vadd.f32 %v669, %v719
    %v721 = vadd.f32 %v670, %v690
    %v722 = vsel %vm232, %v714, 0.0
    %v723 = vsel %vm63, %v722, 0.0
    %v724 = vrot.slane %v723, 4
    %v725 = vadd.f32 %v723, %v724
    %v726 = vrot.slane %v725, 2
    %v727 = vadd.f32 %v725, %v726
    %v728 = vrot.slane %v727, 1
    %v729 = vadd.f32 %v727, %v728
    %v730 = vsel %vm232, %v717, 0.0
    %v731 = vsel %vm63, %v730, 0.0
    %v732 = vrot.slane %v731, 4
    %v733 = vadd.f32 %v731, %v732
    %v734 = vrot.slane %v733, 2
    %v735 = vadd.f32 %v733, %v734
    %v736 = vrot.slane %v735, 1
    %v737 = vadd.f32 %v735, %v736
    %v738 = vsel %vm233, %v729, 0.0
    %v739 = vsel %vm63, %v738, 0.0
    %740 = vadd.xlane.f32.xlu0 %v739
    %v741 = vpop.xlane.xlu0 %740
    %v742 = vrcp.pop %v741
    %v743 = vmul.f32 %v741, %v742
    %v744 = vsub.f32 1.0, %v743
    %v745 = vmul.f32 %v742, %v744
    %v746 = vadd.f32 %v742, %v745
    %vm747 = vweird.f32 %v741
    %vm748 = vweird.f32 %v742
    %vm749 = vmor %vm747, %vm748
    %v750 = vsel %vm749, %v742, %v746
    %v751 = vand.u32 2147483647, %v741
    %vm752 = vcmp.eq.f32.partialorder %v751, 8.507059e+37
    %v753 = vand.u32 %v741, 2147483648
    %v754 = vor.u32 1.1754944e-38, %v753
    %v755 = vsel %vm752, %v754, %v750
    %v756 = vmul.f32 1.0, %v755
    %v757 = vmul.f32 %v729, %v756
    %v758 = vmul.f32 %v737, %v756
    %v759 = vsel %vm233, %v714, 0.0
    %v760 = vsel %vm63, %v759, 0.0
    %761 = vadd.xlane.f32.xlu0 %v760
    %v762 = vpop.xlane.xlu0 %761
    %v763 = vmul.f32 %v762, %v757
    %v764 = vsub.f32 %v714, %v763
    %v765 = vsel %vm232, %v757, %v764
    %v766 = vmul.f32 %v762, %v758
    %v767 = vsub.f32 %v717, %v766
    %v768 = vsel %vm232, %v758, %v767
    %v769 = vlog2.pop %v741
    %v770 = vmul.f32 %v769, 0.6931472
    %v771 = vadd.f32 %v720, %v770
    %v772 = vadd.f32 %v721, %v741
    %v773 = vsel %vm281, %v765, 0.0
    %v774 = vsel %vm63, %v773, 0.0
    %v775 = vrot.slane %v774, 4
    %v776 = vadd.f32 %v774, %v775
    %v777 = vrot.slane %v776, 2
    %v778 = vadd.f32 %v776, %v777
    %v779 = vrot.slane %v778, 1
    %v780 = vadd.f32 %v778, %v779
    %v781 = vsel %vm281, %v768, 0.0
    %v782 = vsel %vm63, %v781, 0.0
    %v783 = vrot.slane %v782, 4
    %v784 = vadd.f32 %v782, %v783
    %v785 = vrot.slane %v784, 2
    %v786 = vadd.f32 %v784, %v785
    %v787 = vrot.slane %v786, 1
    %v788 = vadd.f32 %v786, %v787
    %v789 = vsel %vm282, %v780, 0.0
    %v790 = vsel %vm63, %v789, 0.0
    %791 = vadd.xlane.f32.xlu0 %v790
    %v792 = vpop.xlane.xlu0 %791
    %v793 = vrcp.pop %v792
    %v794 = vmul.f32 %v792, %v793
    %v795 = vsub.f32 1.0, %v794
    %v796 = vmul.f32 %v793, %v795
    %v797 = vadd.f32 %v793, %v796
    %vm798 = vweird.f32 %v792
    %vm799 = vweird.f32 %v793
    %vm800 = vmor %vm798, %vm799
    %v801 = vsel %vm800, %v793, %v797
    %v802 = vand.u32 2147483647, %v792
    %vm803 = vcmp.eq.f32.partialorder %v802, 8.507059e+37
    %v804 = vand.u32 %v792, 2147483648
    %v805 = vor.u32 1.1754944e-38, %v804
    %v806 = vsel %vm803, %v805, %v801
    %v807 = vmul.f32 1.0, %v806
    %v808 = vmul.f32 %v780, %v807
    %v809 = vmul.f32 %v788, %v807
    %v810 = vsel %vm282, %v765, 0.0
    %v811 = vsel %vm63, %v810, 0.0
    %812 = vadd.xlane.f32.xlu0 %v811
    %v813 = vpop.xlane.xlu0 %812
    %v814 = vmul.f32 %v813, %v808
    %v815 = vsub.f32 %v765, %v814
    %v816 = vsel %vm281, %v808, %v815
    %v817 = vmul.f32 %v813, %v809
    %v818 = vsub.f32 %v768, %v817
    %v819 = vsel %vm281, %v809, %v818
    %v820 = vlog2.pop %v792
    %v821 = vmul.f32 %v820, 0.6931472
    %v822 = vadd.f32 %v771, %v821
    %v823 = vadd.f32 %v772, %v792
    %v824 = vsel %vm330, %v816, 0.0
    %v825 = vsel %vm63, %v824, 0.0
    %v826 = vrot.slane %v825, 4
    %v827 = vadd.f32 %v825, %v826
    %v828 = vrot.slane %v827, 2
    %v829 = vadd.f32 %v827, %v828
    %v830 = vrot.slane %v829, 1
    %v831 = vadd.f32 %v829, %v830
    %v832 = vsel %vm330, %v819, 0.0
    %v833 = vsel %vm63, %v832, 0.0
    %v834 = vrot.slane %v833, 4
    %v835 = vadd.f32 %v833, %v834
    %v836 = vrot.slane %v835, 2
    %v837 = vadd.f32 %v835, %v836
    %v838 = vrot.slane %v837, 1
    %v839 = vadd.f32 %v837, %v838
    %v840 = vsel %vm331, %v831, 0.0
    %v841 = vsel %vm63, %v840, 0.0
    %842 = vadd.xlane.f32.xlu0 %v841
    %v843 = vpop.xlane.xlu0 %842
    %v844 = vrcp.pop %v843
    %v845 = vmul.f32 %v843, %v844
    %v846 = vsub.f32 1.0, %v845
    %v847 = vmul.f32 %v844, %v846
    %v848 = vadd.f32 %v844, %v847
    %vm849 = vweird.f32 %v843
    %vm850 = vweird.f32 %v844
    %vm851 = vmor %vm849, %vm850
    %v852 = vsel %vm851, %v844, %v848
    %v853 = vand.u32 2147483647, %v843
    %vm854 = vcmp.eq.f32.partialorder %v853, 8.507059e+37
    %v855 = vand.u32 %v843, 2147483648
    %v856 = vor.u32 1.1754944e-38, %v855
    %v857 = vsel %vm854, %v856, %v852
    %v858 = vmul.f32 1.0, %v857
    %v859 = vmul.f32 %v831, %v858
    %v860 = vmul.f32 %v839, %v858
    %v861 = vsel %vm331, %v816, 0.0
    %v862 = vsel %vm63, %v861, 0.0
    %863 = vadd.xlane.f32.xlu0 %v862
    %v864 = vpop.xlane.xlu0 %863
    %v865 = vmul.f32 %v864, %v859
    %v866 = vsub.f32 %v816, %v865
    %v867 = vsel %vm330, %v859, %v866
    %v868 = vmul.f32 %v864, %v860
    %v869 = vsub.f32 %v819, %v868
    %v870 = vsel %vm330, %v860, %v869
    %v871 = vlog2.pop %v843
    %v872 = vmul.f32 %v871, 0.6931472
    %v873 = vadd.f32 %v822, %v872
    %v874 = vadd.f32 %v823, %v843
    %v875 = vsel %vm379, %v867, 0.0
    %v876 = vsel %vm63, %v875, 0.0
    %v877 = vrot.slane %v876, 4
    %v878 = vadd.f32 %v876, %v877
    %v879 = vrot.slane %v878, 2
    %v880 = vadd.f32 %v878, %v879
    %v881 = vrot.slane %v880, 1
    %v882 = vadd.f32 %v880, %v881
    %v883 = vsel %vm379, %v870, 0.0
    %v884 = vsel %vm63, %v883, 0.0
    %v885 = vrot.slane %v884, 4
    %v886 = vadd.f32 %v884, %v885
    %v887 = vrot.slane %v886, 2
    %v888 = vadd.f32 %v886, %v887
    %v889 = vrot.slane %v888, 1
    %v890 = vadd.f32 %v888, %v889
    %v891 = vsel %vm380, %v882, 0.0
    %v892 = vsel %vm63, %v891, 0.0
    %893 = vadd.xlane.f32.xlu0 %v892
    %v894 = vpop.xlane.xlu0 %893
    %v895 = vrcp.pop %v894
    %v896 = vmul.f32 %v894, %v895
    %v897 = vsub.f32 1.0, %v896
    %v898 = vmul.f32 %v895, %v897
    %v899 = vadd.f32 %v895, %v898
    %vm900 = vweird.f32 %v894
    %vm901 = vweird.f32 %v895
    %vm902 = vmor %vm900, %vm901
    %v903 = vsel %vm902, %v895, %v899
    %v904 = vand.u32 2147483647, %v894
    %vm905 = vcmp.eq.f32.partialorder %v904, 8.507059e+37
    %v906 = vand.u32 %v894, 2147483648
    %v907 = vor.u32 1.1754944e-38, %v906
    %v908 = vsel %vm905, %v907, %v903
    %v909 = vmul.f32 1.0, %v908
    %v910 = vmul.f32 %v882, %v909
    %v911 = vmul.f32 %v890, %v909
    %v912 = vsel %vm380, %v867, 0.0
    %v913 = vsel %vm63, %v912, 0.0
    %914 = vadd.xlane.f32.xlu0 %v913
    %v915 = vpop.xlane.xlu0 %914
    %v916 = vmul.f32 %v915, %v910
    %v917 = vsub.f32 %v867, %v916
    %v918 = vsel %vm379, %v910, %v917
    %v919 = vmul.f32 %v915, %v911
    %v920 = vsub.f32 %v870, %v919
    %v921 = vsel %vm379, %v911, %v920
    %v922 = vlog2.pop %v894
    %v923 = vmul.f32 %v922, 0.6931472
    %v924 = vadd.f32 %v873, %v923
    %v925 = vadd.f32 %v874, %v894
    %v926 = vsel %vm428, %v918, 0.0
    %v927 = vsel %vm63, %v926, 0.0
    %v928 = vrot.slane %v927, 4
    %v929 = vadd.f32 %v927, %v928
    %v930 = vrot.slane %v929, 2
    %v931 = vadd.f32 %v929, %v930
    %v932 = vrot.slane %v931, 1
    %v933 = vadd.f32 %v931, %v932
    %v934 = vsel %vm428, %v921, 0.0
    %v935 = vsel %vm63, %v934, 0.0
    %v936 = vrot.slane %v935, 4
    %v937 = vadd.f32 %v935, %v936
    %v938 = vrot.slane %v937, 2
    %v939 = vadd.f32 %v937, %v938
    %v940 = vrot.slane %v939, 1
    %v941 = vadd.f32 %v939, %v940
    %v942 = vsel %vm429, %v933, 0.0
    %v943 = vsel %vm63, %v942, 0.0
    %944 = vadd.xlane.f32.xlu0 %v943
    %v945 = vpop.xlane.xlu0 %944
    %v946 = vrcp.pop %v945
    %v947 = vmul.f32 %v945, %v946
    %v948 = vsub.f32 1.0, %v947
    %v949 = vmul.f32 %v946, %v948
    %v950 = vadd.f32 %v946, %v949
    %vm951 = vweird.f32 %v945
    %vm952 = vweird.f32 %v946
    %vm953 = vmor %vm951, %vm952
    %v954 = vsel %vm953, %v946, %v950
    %v955 = vand.u32 2147483647, %v945
    %vm956 = vcmp.eq.f32.partialorder %v955, 8.507059e+37
    %v957 = vand.u32 %v945, 2147483648
    %v958 = vor.u32 1.1754944e-38, %v957
    %v959 = vsel %vm956, %v958, %v954
    %v960 = vmul.f32 1.0, %v959
    %v961 = vmul.f32 %v933, %v960
    %v962 = vmul.f32 %v941, %v960
    %v963 = vsel %vm429, %v918, 0.0
    %v964 = vsel %vm63, %v963, 0.0
    %965 = vadd.xlane.f32.xlu0 %v964
    %v966 = vpop.xlane.xlu0 %965
    %v967 = vmul.f32 %v966, %v961
    %v968 = vsub.f32 %v918, %v967
    %v969 = vsel %vm428, %v961, %v968
    %v970 = vmul.f32 %v966, %v962
    %v971 = vsub.f32 %v921, %v970
    %v972 = vsel %vm428, %v962, %v971
    %v973 = vlog2.pop %v945
    %v974 = vmul.f32 %v973, 0.6931472
    %v975 = vadd.f32 %v924, %v974
    %v976 = vadd.f32 %v925, %v945
    %v977 = vsel %vm477, %v969, 0.0
    %v978 = vsel %vm63, %v977, 0.0
    %v979 = vrot.slane %v978, 4
    %v980 = vadd.f32 %v978, %v979
    %v981 = vrot.slane %v980, 2
    %v982 = vadd.f32 %v980, %v981
    %v983 = vrot.slane %v982, 1
    %v984 = vadd.f32 %v982, %v983
    %v985 = vsel %vm477, %v972, 0.0
    %v986 = vsel %vm63, %v985, 0.0
    %v987 = vrot.slane %v986, 4
    %v988 = vadd.f32 %v986, %v987
    %v989 = vrot.slane %v988, 2
    %v990 = vadd.f32 %v988, %v989
    %v991 = vrot.slane %v990, 1
    %v992 = vadd.f32 %v990, %v991
    %v993 = vsel %vm478, %v984, 0.0
    %v994 = vsel %vm63, %v993, 0.0
    %995 = vadd.xlane.f32.xlu0 %v994
    %v996 = vpop.xlane.xlu0 %995
    %v997 = vrcp.pop %v996
    %v998 = vmul.f32 %v996, %v997
    %v999 = vsub.f32 1.0, %v998
    %v1000 = vmul.f32 %v997, %v999
    %v1001 = vadd.f32 %v997, %v1000
    %vm1002 = vweird.f32 %v996
    %vm1003 = vweird.f32 %v997
    %vm1004 = vmor %vm1002, %vm1003
    %v1005 = vsel %vm1004, %v997, %v1001
    %v1006 = vand.u32 2147483647, %v996
    %vm1007 = vcmp.eq.f32.partialorder %v1006, 8.507059e+37
    %v1008 = vand.u32 %v996, 2147483648
    %v1009 = vor.u32 1.1754944e-38, %v1008
    %v1010 = vsel %vm1007, %v1009, %v1005
    %v1011 = vmul.f32 1.0, %v1010
    %v1012 = vmul.f32 %v992, %v1011
    %v1013 = vsel %vm478, %v969, 0.0
    %v1014 = vsel %vm63, %v1013, 0.0
    %1015 = vadd.xlane.f32.xlu0 %v1014
    %v1016 = vpop.xlane.xlu0 %1015
    %v1017 = vmul.f32 %v1016, %v1012
    %v1018 = vsub.f32 %v972, %v1017
    %v1019 = vsel %vm477, %v1012, %v1018
    %v1020 = vlog2.pop %v996
    %v1021 = vmul.f32 %v1020, 0.6931472
    %v1022 = vadd.f32 %v975, %v1021
    %v1023 = vadd.f32 %v976, %v996
    %v1024 = vmul.f32 %v625, %v132
    %v1025 = vsel %vm63, %v1024, 0.0
    %v1026 = vrot.slane %v1025, 4
    %v1027 = vadd.f32 %v1025, %v1026
    %v1028 = vrot.slane %v1027, 2
    %v1029 = vadd.f32 %v1027, %v1028
    %v1030 = vrot.slane %v1029, 1
    %v1031 = vadd.f32 %v1029, %v1030
    %v1032 = vsel %vm53, %v132, 0.0
    %v1033 = vsel %vm63, %v1032, 0.0
    %v1034 = vrot.slane %v1033, 4
    %v1035 = vadd.f32 %v1033, %v1034
    %v1036 = vrot.slane %v1035, 2
    %v1037 = vadd.f32 %v1035, %v1036
    %v1038 = vrot.slane %v1037, 1
    %v1039 = vadd.f32 %v1037, %v1038
    %v1040 = vmul.f32 %v1031, %v1039
    %v1041 = vsel %vm63, %v1040, 0.0
    %1042 = vadd.xlane.f32.xlu0 %v1041
    %v1043 = vpop.xlane.xlu0 %1042
    %v1044 = vsub.f32 14.703016, %v1022
    %v1045 = vadd.f32 %v1044, %v1043
    %v1046 = vmul.f32 %v1045, -0.5
    %v1047 = vsub.f32 %v130, %v1046
    %v1048 = vsel %vm63, %v1019, 0.0
    %v1049 = vrot.slane %v1048, 4
    %v1050 = vadd.f32 %v1048, %v1049
    %v1051 = vrot.slane %v1050, 2
    %v1052 = vadd.f32 %v1050, %v1051
    %v1053 = vrot.slane %v1052, 1
    %v1054 = vadd.f32 %v1052, %v1053
    %v1055 = vsel %vm63, %v1054, 0.0
    %1056 = vadd.xlane.f32.xlu0 %v1055
    %v1057 = vpop.xlane.xlu0 %1056
    %v1058 = vmul.f32 %v1054, %v56
    %vm1059 = vcmask 57344
    %v1060 = vsel %vm1059, %v1058, 0.0
    %1061 = vadd.xlane.f32.xlu0 %v1060
    %v1062 = vpop.xlane.xlu0 %1061
    %v1064 = vperm.slane %v56, 0
    %v1066 = vsel %vm53, %v1064, 0.0
    %v1067 = vsel %vm63, %v1066, 0.0
    %1068 = vadd.xlane.f32.xlu0 %v1067
    %v1069 = vpop.xlane.xlu0 %1068
    %v1070 = vmul.f32 %v1019, %v1064
    %v1071 = vmul.f32 %v1070, %v1069
    %v1072 = vsel %vm63, %v1071, 0.0
    %1073 = vadd.xlane.f32.xlu0 %v1072
    %v1074 = vpop.xlane.xlu0 %1073
    %v1075 = vrot.slane %v1074, 4
    %v1076 = vadd.f32 %v1074, %v1075
    %v1077 = vrot.slane %v1076, 2
    %v1078 = vadd.f32 %v1076, %v1077
    %v1079 = vrot.slane %v1078, 1
    %v1080 = vadd.f32 %v1078, %v1079
    %v1081 = vmul.f32 %v1031, %v1031
    %v1082 = vmul.f32 %v1081, %v1057
    %v1083 = vmul.f32 %v1031, 2.0
    %v1084 = vmul.f32 %v1083, %v1062
    %v1085 = vsub.f32 %v1082, %v1084
    %v1086 = vadd.f32 %v1085, %v1080
    %v1087 = vlog2.pop %v1023
    %v1088 = vmul.f32 %v1087, 0.6931472
    %v1089 = vadd.f32 %v1088, 1.837877
    %v1090 = vmul.f32 %v1089, 0.5
    %v1091 = vmul.f32 %v1086, 0.5
    %v1092 = vsub.f32 %v1047, %v1091
    %v1093 = vsub.f32 %v1092, %v1090
    %v1094 = vmul.f32 %v1093, 1.442695
    %v1095 = vpow.pop %v1094
    %1096 = vst.msk [vmem:[#allocation7] sm:$0x1] %vm1059, %v1095
    // Predicated region
    $region30: #{gaussian_multi_score_forward.1} parent=1 // pred_check
      _
    $region31: #{gaussian_multi_score_forward.1} parent=1 // pred_check_branch
      %1098 = sbr.rel (0) target = $region33
    $region32: #{gaussian_multi_score_forward.1} parent=1 // pred_region
      %1100 = vsyncadd [#allocation4], 0
      %s1102 = sshll.u32 [#allocation7], 4
      %s1103 = int_to_ptr.vmem [resolvable:$true] %s1102
      %s1104 = sshll.u32 %s5, 4
      %s1105 = int_to_ptr.hbm [resolvable:$true] %s1104
      %1107 = dma.vmem_to_hbm [thread:$0]  %s1103, 16, %s1105, [#allocation4]
    $region33: #{gaussian_multi_score_forward.1} parent=1 // pred_fallthru
      _
    // Predicated region
    $region34: #{gaussian_multi_score_forward.1} parent=1 // pred_check
      _
    $region35: #{gaussian_multi_score_forward.1} parent=1 // pred_check_branch
      %1109 = sbr.rel (0) target = $region37
    $region36: #{gaussian_multi_score_forward.1} parent=1 // pred_region
      %1111 = dma.done [#allocation4], 16
    $region37: #{gaussian_multi_score_forward.1} parent=1 // pred_fallthru
      _
    %1112 = vsyncpa [#allocation3], 1
    %1113 = vsyncpa [#allocation6], 1
    %1114 = vsyncpa [#allocation4], 1

</llo_original>
